<compile_context>
chip_gen: v7x
topology: tpu7x:2x2x1
jax: 0.10.0
libtpu: 0.0.40
codegen_flags: <defaults>
</compile_context>

<pallas_src>
import jax
import jax.numpy as jnp
from jax import lax
from jax.experimental import pallas as pl
from jax.experimental.pallas import tpu as pltpu

# ---- model hyper-parameters (small, consistent with the module) ----
B = 2            # batch
S = 8            # sequence length
E = 32           # embed_dim
H = 4            # num_heads
D = E // H       # head_dim

# Python floats only (never capture jnp scalars from module scope).
MASKED_BIAS = -10000.0
INV_SCALE = 1.0 / (float(D) ** 0.5)     # scale_attn_weights


def _attn_kernel(x_ref, wqkv_ref, wp_ref, bias_ref, out_ref):
    """Fused c_attn -> causal MHA -> c_proj (affine folded in) for one batch block."""
    rows = x_ref.shape[0]            # b_local * S  (static at trace time)
    b_local = rows // S

    x = x_ref[...]                   # [rows, E]
    bias = bias_ref[...]             # [1, 4E] = [ qkv bias (3E) | folded output bias (E) ]

    # --- c_attn: ONE lane-dense [rows, E] @ [E, 3E] MXU matmul.
    qkv = jnp.dot(x, wqkv_ref[...], preferred_element_type=jnp.float32)
    qkv = qkv + bias[:, :3 * E]                                   # [rows, 3E]

    # --- split into per-(head, batch) [S, D] tiles using lane slices + row reshapes
    # only (no 4-D transposes). g = h * b_local + b.
    def heads(col0):
        parts = [qkv[:, col0 + h * D: col0 + (h + 1) * D].reshape(b_local, S, D)
                 for h in range(H)]
        return jnp.concatenate(parts, axis=0)                     # [H*b_local, S, D]

    q = heads(0)
    k = heads(E)
    v = heads(2 * E)

    # --- scores: contract over head_dim directly, scale, causal mask (in-kernel iota,
    # exact torch.where(mask, w, -1e4) semantics).
    s = jnp.einsum('gqd,gkd->gqk', q, k,
                   preferred_element_type=jnp.float32) * INV_SCALE   # [G, S, S]
    row_ids = lax.broadcasted_iota(jnp.int32, (S, S), 0)
    col_ids = lax.broadcasted_iota(jnp.int32, (S, S), 1)
    s = jnp.where((col_ids <= row_ids)[None], s, MASKED_BIAS)

    # --- softmax over keys (EUP exp + approx reciprocal; no divide).
    m = jnp.max(s, axis=-1, keepdims=True)
    e = jnp.exp(s - m)
    p = e * pl.reciprocal(jnp.sum(e, axis=-1, keepdims=True), approx=True)

    # --- weighted values.
    o = jnp.einsum('gqk,gkd->gqd', p, v,
                   preferred_element_type=jnp.float32)            # [G, S, D]

    # --- merge heads back to [rows, E] (lane concat), then ONE c_proj matmul with the
    # AffineNet already folded into the weight / bias.
    merged = jnp.concatenate(
        [o[h * b_local:(h + 1) * b_local].reshape(rows, D) for h in range(H)],
        axis=-1)                                                  # [rows, E]
    out_ref[...] = (jnp.dot(merged, wp_ref[...], preferred_element_type=jnp.float32)
                    + bias[:, 3 * E:])


def prepare_params(w_qkv, b_qkv, w_proj, b_proj, affine_w, affine_b):
    """One-time parameter preprocessing (hoisted out of the per-call path).

    Folds:  (o @ Wp + bp) * gamma + beta  ==  o @ (Wp * gamma) + (bp * gamma + beta)
    and packs [qkv bias | folded output bias] into a single [1, 4E] slab.
    """
    wp_scaled = (w_proj * affine_w[None, :]).astype(jnp.float32)          # [E, E]
    out_bias = (b_proj * affine_w + affine_b).astype(jnp.float32)         # [E]
    bias_slab = jnp.concatenate([b_qkv.astype(jnp.float32), out_bias]
                                ).reshape(1, 4 * E)                       # [1, 128]
    return w_qkv.astype(jnp.float32), wp_scaled, bias_slab


def _num_parallel_cores():
    """v7x has 2 TensorCores per chip; v5e/v6e have 1."""
    try:
        kind = jax.devices()[0].device_kind.lower()
    except Exception:
        return 1
    return 2 if ("v7" in kind or "tpu7" in kind) else 1


def _build_pallas_call(num_cores):
    rows = B * S
    out_shape = jax.ShapeDtypeStruct((rows, E), jnp.float32)

    # Guard the monolithic VMEM-resident design against accidental scale-up.
    est_bytes = 4 * (rows * 4 * E + E * 3 * E + E * E + 4 * E
                     + 3 * B * H * S * S + rows * E)
    assert est_bytes < (4 << 20), \
        "TODO(synk): retile as a flash-style kernel before scaling S/E"

    if num_cores > 1 and B % num_cores == 0:
        # v7x: shard the batch across both TensorCores.
        return pl.pallas_call(
            _attn_kernel,
            out_shape=out_shape,
            grid=(B,),
            in_specs=[
                pl.BlockSpec((S, E), lambda b: (b, 0)),        # hidden block per batch
                pl.BlockSpec((E, 3 * E), lambda b: (0, 0)),    # fused qkv weight
                pl.BlockSpec((E, E), lambda b: (0, 0)),        # affine-folded proj weight
                pl.BlockSpec((1, 4 * E), lambda b: (0, 0)),    # packed bias slab
            ],
            out_specs=pl.BlockSpec((S, E), lambda b: (b, 0)),
            compiler_params=pltpu.CompilerParams(dimension_semantics=("parallel",)),
        )

    # v5e / v6e: one gridless invocation (a serial grid only adds per-step overhead).
    vmem = pltpu.MemorySpace.VMEM
    return pl.pallas_call(
        _attn_kernel,
        out_shape=out_shape,
        in_specs=[pl.BlockSpec(memory_space=vmem)] * 4,
        out_specs=pl.BlockSpec(memory_space=vmem),
    )


def make_affine_gpt2_attention():
    """Build the jitted forward once (pallas_call construction hoisted out of calls)."""
    call = _build_pallas_call(_num_parallel_cores())

    @jax.jit
    def apply(hidden_states, w_qkv, wp_scaled, bias_slab):
        x2d = hidden_states.reshape(B * S, E)                 # free metadata reshape
        out2d = call(x2d, w_qkv, wp_scaled, bias_slab)
        return out2d.reshape(B, S, E)

    return apply


def _reference(hidden_states, w_qkv, b_qkv, w_proj, b_proj, affine_w, affine_b):
    """Pure-JAX reference mirroring the PyTorch forward (eval mode)."""
    qkv = hidden_states @ w_qkv + b_qkv                       # [B, S, 3E]
    q, k, v = jnp.split(qkv, 3, axis=-1)

    def split_heads(t):                                       # [B,S,E] -> [B,H,S,D]
        return t.reshape(B, S, H, D).transpose(0, 2, 1, 3)

    q, k, v = split_heads(q), split_heads(k), split_heads(v)
    w = jnp.einsum('bhqd,bhkd->bhqk', q, k) / jnp.sqrt(jnp.float32(D))
    causal = jnp.tril(jnp.ones((S, S), dtype=bool))
    w = jnp.where(causal[None, None], w, MASKED_BIAS)
    p = jax.nn.softmax(w, axis=-1)
    o = jnp.einsum('bhqk,bhkd->bhqd', p, v)
    o = o.transpose(0, 2, 1, 3).reshape(B, S, E)
    o = o @ w_proj + b_proj
    return o * affine_w + affine_b


if __name__ == "__main__":
    key = jax.random.PRNGKey(0)
    k1, k2, k3, k4, k5, k6, k7 = jax.random.split(key, 7)

    hidden_states = jax.random.normal(k1, (B, S, E), dtype=jnp.float32)

    # deterministic GPT-2-style params; biases/affine nonzero to exercise all paths
    w_qkv = 0.02 * jax.random.normal(k2, (E, 3 * E), dtype=jnp.float32)
    b_qkv = 0.02 * jax.random.normal(k3, (3 * E,), dtype=jnp.float32)
    w_proj = 0.02 * jax.random.normal(k4, (E, E), dtype=jnp.float32)
    b_proj = 0.02 * jax.random.normal(k5, (E,), dtype=jnp.float32)
    affine_w = 1.0 + 0.1 * jax.random.normal(k6, (E,), dtype=jnp.float32)
    affine_b = 0.1 * jax.random.normal(k7, (E,), dtype=jnp.float32)

    # one-time hoisted parameter preprocessing + kernel construction
    w_qkv_p, wp_scaled, bias_slab = prepare_params(
        w_qkv, b_qkv, w_proj, b_proj, affine_w, affine_b)
    attn = make_affine_gpt2_attention()

    out = attn(hidden_states, w_qkv_p, wp_scaled, bias_slab)
    out = jax.block_until_ready(out)

    ref = _reference(hidden_states, w_qkv, b_qkv, w_proj, b_proj,
                     affine_w, affine_b)
    assert out.shape == (B, S, E)
    assert jnp.allclose(out, ref, atol=1e-3, rtol=1e-3), "mismatch vs reference"

    print("KERNEL_OK")
</pallas_src>

<mosaic_0001>
module attributes {stable_mosaic.version = 11 : i64} {
  func.func @_attn_kernel(%arg0: memref<16x32xf32, #tpu.memory_space<vmem>>, %arg1: memref<32x96xf32, #tpu.memory_space<vmem>>, %arg2: memref<32x32xf32, #tpu.memory_space<vmem>>, %arg3: memref<1x128xf32, #tpu.memory_space<vmem>>, %arg4: memref<16x32xf32, #tpu.memory_space<vmem>>) attributes {dimension_semantics = [], scalar_prefetch = 0 : i64, scratch_operands = 0 : i64, tpu.core_type = #tpu.core_type<tc>} {
    %c0 = arith.constant 0 : index
    %c0_0 = arith.constant 0 : index
    %0 = vector.load %arg0[%c0, %c0_0] : memref<16x32xf32, #tpu.memory_space<vmem>>, vector<16x32xf32>
    %c0_1 = arith.constant 0 : index
    %c0_2 = arith.constant 0 : index
    %1 = vector.load %arg3[%c0_1, %c0_2] : memref<1x128xf32, #tpu.memory_space<vmem>>, vector<1x128xf32>
    %c0_3 = arith.constant 0 : index
    %c0_4 = arith.constant 0 : index
    %2 = vector.load %arg1[%c0_3, %c0_4] : memref<32x96xf32, #tpu.memory_space<vmem>>, vector<32x96xf32>
    %cst = arith.constant dense<0.000000e+00> : vector<16x96xf32>
    %3 = tpu.matmul %0, %2, %cst {dimension_numbers = #tpu.dot_dimension_numbers<[1], [0], [0], [1], [0, 0, 1, 1], [], []>} : vector<16x32xf32>, vector<32x96xf32>, vector<16x96xf32> -> vector<16x96xf32>
    %4 = vector.extract_strided_slice %1 {offsets = [0, 0], sizes = [1, 96], strides = [1, 1]} : vector<1x128xf32> to vector<1x96xf32>
    %5 = vector.broadcast %4 : vector<1x96xf32> to vector<16x96xf32>
    %6 = arith.addf %3, %5 : vector<16x96xf32>
    %7 = vector.extract_strided_slice %6 {offsets = [0, 0], sizes = [16, 8], strides = [1, 1]} : vector<16x96xf32> to vector<16x8xf32>
    %8 = vector.shape_cast %7 : vector<16x8xf32> to vector<2x8x8xf32>
    %9 = vector.extract_strided_slice %6 {offsets = [0, 8], sizes = [16, 8], strides = [1, 1]} : vector<16x96xf32> to vector<16x8xf32>
    %10 = vector.shape_cast %9 : vector<16x8xf32> to vector<2x8x8xf32>
    %11 = vector.extract_strided_slice %6 {offsets = [0, 16], sizes = [16, 8], strides = [1, 1]} : vector<16x96xf32> to vector<16x8xf32>
    %12 = vector.shape_cast %11 : vector<16x8xf32> to vector<2x8x8xf32>
    %13 = vector.extract_strided_slice %6 {offsets = [0, 24], sizes = [16, 8], strides = [1, 1]} : vector<16x96xf32> to vector<16x8xf32>
    %14 = vector.shape_cast %13 : vector<16x8xf32> to vector<2x8x8xf32>
    %15 = tpu.concatenate %8, %10, %12, %14 in 0 : vector<2x8x8xf32>, vector<2x8x8xf32>, vector<2x8x8xf32>, vector<2x8x8xf32> -> vector<8x8x8xf32>
    %16 = vector.extract_strided_slice %6 {offsets = [0, 32], sizes = [16, 8], strides = [1, 1]} : vector<16x96xf32> to vector<16x8xf32>
    %17 = vector.shape_cast %16 : vector<16x8xf32> to vector<2x8x8xf32>
    %18 = vector.extract_strided_slice %6 {offsets = [0, 40], sizes = [16, 8], strides = [1, 1]} : vector<16x96xf32> to vector<16x8xf32>
    %19 = vector.shape_cast %18 : vector<16x8xf32> to vector<2x8x8xf32>
    %20 = vector.extract_strided_slice %6 {offsets = [0, 48], sizes = [16, 8], strides = [1, 1]} : vector<16x96xf32> to vector<16x8xf32>
    %21 = vector.shape_cast %20 : vector<16x8xf32> to vector<2x8x8xf32>
    %22 = vector.extract_strided_slice %6 {offsets = [0, 56], sizes = [16, 8], strides = [1, 1]} : vector<16x96xf32> to vector<16x8xf32>
    %23 = vector.shape_cast %22 : vector<16x8xf32> to vector<2x8x8xf32>
    %24 = tpu.concatenate %17, %19, %21, %23 in 0 : vector<2x8x8xf32>, vector<2x8x8xf32>, vector<2x8x8xf32>, vector<2x8x8xf32> -> vector<8x8x8xf32>
    %25 = vector.extract_strided_slice %6 {offsets = [0, 64], sizes = [16, 8], strides = [1, 1]} : vector<16x96xf32> to vector<16x8xf32>
    %26 = vector.shape_cast %25 : vector<16x8xf32> to vector<2x8x8xf32>
    %27 = vector.extract_strided_slice %6 {offsets = [0, 72], sizes = [16, 8], strides = [1, 1]} : vector<16x96xf32> to vector<16x8xf32>
    %28 = vector.shape_cast %27 : vector<16x8xf32> to vector<2x8x8xf32>
    %29 = vector.extract_strided_slice %6 {offsets = [0, 80], sizes = [16, 8], strides = [1, 1]} : vector<16x96xf32> to vector<16x8xf32>
    %30 = vector.shape_cast %29 : vector<16x8xf32> to vector<2x8x8xf32>
    %31 = vector.extract_strided_slice %6 {offsets = [0, 88], sizes = [16, 8], strides = [1, 1]} : vector<16x96xf32> to vector<16x8xf32>
    %32 = vector.shape_cast %31 : vector<16x8xf32> to vector<2x8x8xf32>
    %33 = tpu.concatenate %26, %28, %30, %32 in 0 : vector<2x8x8xf32>, vector<2x8x8xf32>, vector<2x8x8xf32>, vector<2x8x8xf32> -> vector<8x8x8xf32>
    "tpu.trace_start"() <{level = 10 : i32, message = "gqd,gkd->gqk"}> : () -> ()
    %cst_5 = arith.constant dense<0.000000e+00> : vector<8x8x8xf32>
    %34 = tpu.matmul %15, %24, %cst_5 {dimension_numbers = #tpu.dot_dimension_numbers<[2], [2], [1], [1], [0, 0, 0, 1, 1, 1], [0], [0]>} : vector<8x8x8xf32>, vector<8x8x8xf32>, vector<8x8x8xf32> -> vector<8x8x8xf32>
    "tpu.trace_stop"() : () -> ()
    %cst_6 = arith.constant 0.353553385 : f32
    %35 = vector.broadcast %cst_6 : f32 to vector<8x8x8xf32>
    %36 = arith.mulf %34, %35 : vector<8x8x8xf32>
    %37 = tpu.iota {dimensions = array<i32: 0>} : vector<8x8xi32>
    %38 = tpu.iota {dimensions = array<i32: 1>} : vector<8x8xi32>
    %39 = arith.cmpi sle, %38, %37 : vector<8x8xi32>
    %40 = vector.shape_cast %39 : vector<8x8xi1> to vector<1x8x8xi1>
    %cst_7 = arith.constant -1.000000e+04 : f32
    %41 = vector.shape_cast %40 : vector<1x8x8xi1> to vector<1x8x8xi1>
    %42 = vector.broadcast %41 : vector<1x8x8xi1> to vector<8x8x8xi1>
    %43 = vector.broadcast %cst_7 : f32 to vector<8x8x8xf32>
    %44 = arith.select %42, %36, %43 : vector<8x8x8xi1>, vector<8x8x8xf32>
    %cst_8 = arith.constant dense<0xFF800000> : vector<8x8xf32>
    %45 = vector.multi_reduction <maximumf>, %44, %cst_8 [2] : vector<8x8x8xf32> to vector<8x8xf32>
    %46 = vector.shape_cast %45 : vector<8x8xf32> to vector<8x8x1xf32>
    %47 = vector.broadcast %46 : vector<8x8x1xf32> to vector<8x8x8xf32>
    %48 = arith.subf %44, %47 : vector<8x8x8xf32>
    %49 = math.exp %48 : vector<8x8x8xf32>
    %cst_9 = arith.constant dense<0.000000e+00> : vector<8x8xf32>
    %50 = vector.multi_reduction <add>, %49, %cst_9 [2] : vector<8x8x8xf32> to vector<8x8xf32>
    %51 = vector.shape_cast %50 : vector<8x8xf32> to vector<8x8x1xf32>
    %52 = tpu.reciprocal %51 {approx = true} : vector<8x8x1xf32> -> vector<8x8x1xf32>
    %53 = vector.broadcast %52 : vector<8x8x1xf32> to vector<8x8x8xf32>
    %54 = arith.mulf %49, %53 : vector<8x8x8xf32>
    "tpu.trace_start"() <{level = 10 : i32, message = "gqk,gkd->gqd"}> : () -> ()
    %cst_10 = arith.constant dense<0.000000e+00> : vector<8x8x8xf32>
    %55 = tpu.matmul %54, %33, %cst_10 {dimension_numbers = #tpu.dot_dimension_numbers<[2], [1], [1], [2], [0, 0, 0, 1, 1, 2], [0], [0]>} : vector<8x8x8xf32>, vector<8x8x8xf32>, vector<8x8x8xf32> -> vector<8x8x8xf32>
    "tpu.trace_stop"() : () -> ()
    %56 = vector.extract_strided_slice %55 {offsets = [0, 0, 0], sizes = [2, 8, 8], strides = [1, 1, 1]} : vector<8x8x8xf32> to vector<2x8x8xf32>
    %57 = vector.shape_cast %56 : vector<2x8x8xf32> to vector<16x8xf32>
    %58 = vector.extract_strided_slice %55 {offsets = [2, 0, 0], sizes = [2, 8, 8], strides = [1, 1, 1]} : vector<8x8x8xf32> to vector<2x8x8xf32>
    %59 = vector.shape_cast %58 : vector<2x8x8xf32> to vector<16x8xf32>
    %60 = vector.extract_strided_slice %55 {offsets = [4, 0, 0], sizes = [2, 8, 8], strides = [1, 1, 1]} : vector<8x8x8xf32> to vector<2x8x8xf32>
    %61 = vector.shape_cast %60 : vector<2x8x8xf32> to vector<16x8xf32>
    %62 = vector.extract_strided_slice %55 {offsets = [6, 0, 0], sizes = [2, 8, 8], strides = [1, 1, 1]} : vector<8x8x8xf32> to vector<2x8x8xf32>
    %63 = vector.shape_cast %62 : vector<2x8x8xf32> to vector<16x8xf32>
    %64 = tpu.concatenate %57, %59, %61, %63 in 1 : vector<16x8xf32>, vector<16x8xf32>, vector<16x8xf32>, vector<16x8xf32> -> vector<16x32xf32>
    %c0_11 = arith.constant 0 : index
    %c0_12 = arith.constant 0 : index
    %65 = vector.load %arg2[%c0_11, %c0_12] : memref<32x32xf32, #tpu.memory_space<vmem>>, vector<32x32xf32>
    %cst_13 = arith.constant dense<0.000000e+00> : vector<16x32xf32>
    %66 = tpu.matmul %64, %65, %cst_13 {dimension_numbers = #tpu.dot_dimension_numbers<[1], [0], [0], [1], [0, 0, 1, 1], [], []>} : vector<16x32xf32>, vector<32x32xf32>, vector<16x32xf32> -> vector<16x32xf32>
    %67 = vector.extract_strided_slice %1 {offsets = [0, 96], sizes = [1, 32], strides = [1, 1]} : vector<1x128xf32> to vector<1x32xf32>
    %68 = vector.broadcast %67 : vector<1x32xf32> to vector<16x32xf32>
    %69 = arith.addf %66, %68 : vector<16x32xf32>
    %c0_14 = arith.constant 0 : index
    %c0_15 = arith.constant 0 : index
    %70 = vector.load %arg4[%c0_14, %c0_15] : memref<16x32xf32, #tpu.memory_space<vmem>>, vector<16x32xf32>
    tpu.vector_store %arg4[%c0_14, %c0_15], %69 {strides = array<i32>} : memref<16x32xf32, #tpu.memory_space<vmem>>, vector<16x32xf32>,
    return
  }
}

</mosaic_0001>

<llo_original>
// kernel: apply.1
$region0: #{apply.1}
  #allocation0 [shape = 'u32[]', space=smem, size = 0x4, offset = 0x4, fixed_abs, tag = 'smem constant byte address 0x4 - core index']
  #allocation1 [shape = 'u32[144,128]{1,0:T(1,128)}', space=vmem, size = 0x12000, scoped, tag = 'internal scratch']
  %s0 = inlined_call_operand.hbm [shape: f32[16,32], index: 0, kind: input, shape index: {}]
  %s1 = inlined_call_operand.hbm [shape: f32[32,96], index: 1, kind: input, shape index: {}]
  %s2 = inlined_call_operand.hbm [shape: f32[32,32], index: 2, kind: input, shape index: {}]
  %s3 = inlined_call_operand.vmem [shape: f32[1,128], index: 3, kind: input, shape index: {}]
  %s4 = inlined_call_operand.hbm [shape: f32[16,32], index: 4, kind: output, shape index: {}]
  %s5 = sld [smem:[#allocation0]]
  $region38: #{apply.1} parent=0
    _
  %s7 = ssub.s32 1, %s5
  %s8 = scalar_select 0, %s7, %s5
  $region1: #{apply.1} parent=0
    #allocation2 [shape = 'u8[8192]{0}', space=vmem, size = 0x2000, scoped, tag = 'input window, operand 0, single buffered']
    #allocation3 [shape = 's32[1]{0}', space=sflag, size = 0x4, scoped, tag = 'scoped memory for apply.1']
    #allocation4 [shape = 's32[1]{0}', space=sflag, size = 0x4, scoped, tag = 'scoped memory for apply.1']
    #allocation5 [shape = 'u8[16384]{0}', space=vmem, size = 0x4000, scoped, tag = 'input window, operand 1, single buffered']
    #allocation6 [shape = 's32[1]{0}', space=sflag, size = 0x4, scoped, tag = 'scoped memory for apply.1']
    #allocation7 [shape = 'u8[16384]{0}', space=vmem, size = 0x4000, scoped, tag = 'input window, operand 2, single buffered']
    #allocation8 [shape = 'u8[8192]{0}', space=vmem, size = 0x2000, scoped, tag = 'output window, operand 0, single buffered']
    %9 = vsyncpa [#allocation3], 0
    %10 = vsyncpa [#allocation6], 0
    %11 = vsyncpa [#allocation4], 0
    // Predicated region
    $region2: #{apply.1} parent=1 // pred_check
      _
    $region3: #{apply.1} parent=1 // pred_check_branch
      %13 = sbr.rel (0) target = $region5
    $region4: #{apply.1} parent=1 // pred_region
      %s15 = ssub.s32 256, 256
      %16 = vsyncadd [#allocation3], %s15
      %s17 = sshll.u32 [#allocation2], 4
      %s18 = int_to_ptr.vmem [resolvable:$true] %s17
      %23 = dma.hbm_to_vmem [thread:$0]  %s0, 256, %s18, [#allocation3], 128, 128, 8
    $region5: #{apply.1} parent=1 // pred_fallthru
      _
    // Predicated region
    $region6: #{apply.1} parent=1 // pred_check
      _
    $region7: #{apply.1} parent=1 // pred_check_branch
      %25 = sbr.rel (0) target = $region9
    $region8: #{apply.1} parent=1 // pred_region
      %s27 = ssub.s32 512, 512
      %28 = vsyncadd [#allocation6], %s27
      %s29 = sshll.u32 [#allocation5], 4
      %s30 = int_to_ptr.vmem [resolvable:$true] %s29
      %35 = dma.hbm_to_vmem [thread:$0]  %s1, 512, %s30, [#allocation6], 128, 128, 8
    $region9: #{apply.1} parent=1 // pred_fallthru
      _
    // Predicated region
    $region10: #{apply.1} parent=1 // pred_check
      _
    $region11: #{apply.1} parent=1 // pred_check_branch
      %37 = sbr.rel (0) target = $region13
    $region12: #{apply.1} parent=1 // pred_region
      %s39 = ssub.s32 512, 512
      %40 = vsyncadd [#allocation6], %s39
      %s41 = sshll.u32 [#allocation7], 4
      %s42 = int_to_ptr.vmem [resolvable:$true] %s41
      %47 = dma.hbm_to_vmem [thread:$0]  %s2, 512, %s42, [#allocation6], 128, 128, 8
    $region13: #{apply.1} parent=1 // pred_fallthru
      _
    // Predicated region
    $region14: #{apply.1} parent=1 // pred_check
      _
    $region15: #{apply.1} parent=1 // pred_check_branch
      %49 = sbr.rel (0) target = $region17
    $region16: #{apply.1} parent=1 // pred_region
      _
    $region17: #{apply.1} parent=1 // pred_fallthru
      _
    // Predicated region
    $region18: #{apply.1} parent=1 // pred_check
      _
    $region19: #{apply.1} parent=1 // pred_check_branch
      %51 = sbr.rel (0) target = $region21
    $region20: #{apply.1} parent=1 // pred_region
      %52 = dma.done [#allocation3], 256
    $region21: #{apply.1} parent=1 // pred_fallthru
      _
    // Predicated region
    $region22: #{apply.1} parent=1 // pred_check
      _
    $region23: #{apply.1} parent=1 // pred_check_branch
      %54 = sbr.rel (0) target = $region25
    $region24: #{apply.1} parent=1 // pred_region
      %55 = dma.done [#allocation6], 512
    $region25: #{apply.1} parent=1 // pred_fallthru
      _
    // Predicated region
    $region26: #{apply.1} parent=1 // pred_check
      _
    $region27: #{apply.1} parent=1 // pred_check_branch
      %57 = sbr.rel (0) target = $region29
    $region28: #{apply.1} parent=1 // pred_region
      %58 = dma.done [#allocation6], 512
    $region29: #{apply.1} parent=1 // pred_fallthru
      _
    %v59 = vld [vmem:[#allocation2] sm:$0xff]
    %v60 = vld [vmem:[#allocation2 + $0x8] sm:$0xff]
    %v61 = vld [vmem:[%s3] sm:$0x1]
    %v62 = vld [vmem:[#allocation5] sm:$0xff]
    %v63 = vld [vmem:[#allocation5 + $0x8] sm:$0xff]
    %v64 = vld [vmem:[#allocation5 + $0x10] sm:$0xff]
    %v65 = vld [vmem:[#allocation5 + $0x18] sm:$0xff]
    %v67 = vlaneseq
    %v68 = vshrl.u32 %v67, 7
    %v69 = vsub.s32 0, %v68
    %v70 = vrot.slane %v61, %v69
    %vm72 = vcmask 261120
    %v74 = vsel %vm72, %v59, 0
    %v77 = vsel %vm72, %v60, 0
    %79 = vmatprep.subr.mxu0 0.0
    %80 = vmatpush1.msra.mxu0 %v62
    %81 = vmatprep.subr.mxu0 0.0
    %82 = vmatpush1.msra.mxu0 %v63
    %83 = vmatprep.subr.mxu0 0.0
    %84 = vmatpush1.msra.mxu0 %v64
    %85 = vmatprep.subr.mxu0 0.0
    %86 = vmatpush1.msra.mxu0 %v65
    %87 = vmatprep.subr.mxu0 0.0
    %88 = vmatpush1.msra.mxu0 0.0
    %89 = vmatprep.subr.mxu0 0.0
    %90 = vmatpush1.msra.mxu0 0.0
    %91 = vmatprep.subr.mxu0 0.0
    %92 = vmatpush1.msra.mxu0 0.0
    %93 = vmatprep.subr.mxu0 0.0
    %94 = vmatpush1.msra.mxu0 0.0
    %95 = vmatprep.subr.mxu0 0.0
    %96 = vmatpush1.msra.mxu0 0.0
    %97 = vmatprep.subr.mxu0 0.0
    %98 = vmatpush1.msra.mxu0 0.0
    %99 = vmatprep.subr.mxu0 0.0
    %100 = vmatpush1.msra.mxu0 0.0
    %101 = vmatprep.subr.mxu0 0.0
    %102 = vmatpush1.msra.mxu0 0.0
    %103 = vmatprep.subr.mxu0 0.0
    %104 = vmatpush1.msra.mxu0 0.0
    %105 = vmatprep.subr.mxu0 0.0
    %106 = vmatpush1.msra.mxu0 0.0
    %107 = vmatprep.subr.mxu0 0.0
    %108 = vmatpush1.msra.mxu0 0.0
    %109 = vmatprep.subr.mxu0 0.0
    %110 = vmatpush1.msra.mxu0 0.0
    %111 = vmatprep.subr.mxu0 0.0
    %112 = vmatpush1.msra.mxu0 0.0
    %113 = vmatprep.subr.mxu0 0.0
    %114 = vmatpush1.msra.mxu0 0.0
    %115 = vmatprep.subr.mxu0 0.0
    %116 = vmatpush1.msra.mxu0 0.0
    %117 = vmatprep.subr.mxu0 0.0
    %118 = vmatpush1.msra.mxu0 0.0
    %119 = vmatprep.subr.mxu0 0.0
    %120 = vmatpush1.msra.mxu0 0.0
    %121 = vmatprep.subr.mxu0 0.0
    %122 = vmatpush1.msra.mxu0 0.0
    %123 = vmatprep.subr.mxu0 0.0
    %124 = vmatpush1.msra.mxu0 0.0
    %125 = vmatprep.subr.mxu0 0.0
    %126 = vmatpush1.msra.mxu0 0.0
    %127 = vmatprep.subr.mxu0 0.0
    %128 = vmatpush1.msra.mxu0 0.0
    %129 = vmatprep.subr.mxu0 0.0
    %130 = vmatpush1.msra.mxu0 0.0
    %131 = vmatprep.subr.mxu0 0.0
    %132 = vmatpush1.msra.mxu0 0.0
    %133 = vmatprep.subr.mxu0 0.0
    %134 = vmatpush1.msra.mxu0 0.0
    %135 = vmatprep.subr.mxu0 0.0
    %136 = vmatpush1.msra.mxu0 0.0
    %137 = vmatprep.subr.mxu0 0.0
    %138 = vmatpush1.msra.mxu0 0.0
    %139 = vmatprep.subr.mxu0 0.0
    %140 = vmatpush1.msra.mxu0 0.0
    %141 = vmatprep.subr.mxu0 0.0
    %142 = vmatpush1.msra.mxu0 0.0
    %143 = vmatprep.mubr.f32.mxu0 0.0
    %144 = vmatmul.mubr.f32.gmra.mrb[0].mxu0 %v74
    %v145 = vpop.f32.mrb[0].mxu0
    %v146 = vadd.f32 %v70, %v145
    %v147 = vpop.f32.mrb[0].mxu0
    %148 = vmatprep.mubr.f32.mxu0 0.0
    %149 = vmatmul.mubr.f32.gmra.mrb[0].mxu0 %v77
    %v150 = vpop.f32.mrb[0].mxu0
    %v151 = vadd.f32 %v70, %v150
    %v152 = vpop.f32.mrb[0].mxu0
    %153 = vdwg.mxu0
    %156 = vrot.lane.b32.xlu0 %v146, 120
    %v157 = vpop.permute.xlu0 %156
    %158 = vrot.lane.b32.xlu0 %v151, 120
    %v159 = vpop.permute.xlu0 %158
    %160 = vrot.lane.b32.xlu0 %v146, 112
    %v161 = vpop.permute.xlu0 %160
    %162 = vrot.lane.b32.xlu0 %v151, 112
    %v163 = vpop.permute.xlu0 %162
    %164 = vrot.lane.b32.xlu0 %v146, 104
    %v165 = vpop.permute.xlu0 %164
    %166 = vrot.lane.b32.xlu0 %v151, 104
    %v167 = vpop.permute.xlu0 %166
    %168 = vrot.lane.b32.xlu0 %v146, 96
    %v169 = vpop.permute.xlu0 %168
    %vm170 = vcmask 64512
    %v171 = vsel %vm170, %v146, 0
    %v173 = vsel %vm170, %v169, 0
    %175 = vmatprep.subr.mxu0 0.0
    %176 = vmatpush1.xpose.msra.mxu0 %v173
    %177 = vmatprep.subr.mxu0 0.0
    %178 = vmatpush1.xpose.msra.mxu0 0.0
    %179 = vmatprep.subr.mxu0 0.0
    %180 = vmatpush1.xpose.msra.mxu0 0.0
    %181 = vmatprep.subr.mxu0 0.0
    %182 = vmatpush1.xpose.msra.mxu0 0.0
    %183 = vmatprep.subr.mxu0 0.0
    %184 = vmatpush1.xpose.msra.mxu0 0.0
    %185 = vmatprep.subr.mxu0 0.0
    %186 = vmatpush1.xpose.msra.mxu0 0.0
    %187 = vmatprep.subr.mxu0 0.0
    %188 = vmatpush1.xpose.msra.mxu0 0.0
    %189 = vmatprep.subr.mxu0 0.0
    %190 = vmatpush1.xpose.msra.mxu0 0.0
    %191 = vmatprep.subr.mxu0 0.0
    %192 = vmatpush1.xpose.msra.mxu0 0.0
    %193 = vmatprep.subr.mxu0 0.0
    %194 = vmatpush1.xpose.msra.mxu0 0.0
    %195 = vmatprep.subr.mxu0 0.0
    %196 = vmatpush1.xpose.msra.mxu0 0.0
    %197 = vmatprep.subr.mxu0 0.0
    %198 = vmatpush1.xpose.msra.mxu0 0.0
    %199 = vmatprep.subr.mxu0 0.0
    %200 = vmatpush1.xpose.msra.mxu0 0.0
    %201 = vmatprep.subr.mxu0 0.0
    %202 = vmatpush1.xpose.msra.mxu0 0.0
    %203 = vmatprep.subr.mxu0 0.0
    %204 = vmatpush1.xpose.msra.mxu0 0.0
    %205 = vmatprep.subr.mxu0 0.0
    %206 = vmatpush1.xpose.msra.mxu0 0.0
    %207 = vmatprep.subr.mxu0 0.0
    %208 = vmatpush1.xpose.msra.mxu0 0.0
    %209 = vmatprep.subr.mxu0 0.0
    %210 = vmatpush1.xpose.msra.mxu0 0.0
    %211 = vmatprep.subr.mxu0 0.0
    %212 = vmatpush1.xpose.msra.mxu0 0.0
    %213 = vmatprep.subr.mxu0 0.0
    %214 = vmatpush1.xpose.msra.mxu0 0.0
    %215 = vmatprep.subr.mxu0 0.0
    %216 = vmatpush1.xpose.msra.mxu0 0.0
    %217 = vmatprep.subr.mxu0 0.0
    %218 = vmatpush1.xpose.msra.mxu0 0.0
    %219 = vmatprep.subr.mxu0 0.0
    %220 = vmatpush1.xpose.msra.mxu0 0.0
    %221 = vmatprep.subr.mxu0 0.0
    %222 = vmatpush1.xpose.msra.mxu0 0.0
    %223 = vmatprep.subr.mxu0 0.0
    %224 = vmatpush1.xpose.msra.mxu0 0.0
    %225 = vmatprep.subr.mxu0 0.0
    %226 = vmatpush1.xpose.msra.mxu0 0.0
    %227 = vmatprep.subr.mxu0 0.0
    %228 = vmatpush1.xpose.msra.mxu0 0.0
    %229 = vmatprep.subr.mxu0 0.0
    %230 = vmatpush1.xpose.msra.mxu0 0.0
    %231 = vmatprep.subr.mxu0 0.0
    %232 = vmatpush1.xpose.msra.mxu0 0.0
    %233 = vmatprep.subr.mxu0 0.0
    %234 = vmatpush1.xpose.msra.mxu0 0.0
    %235 = vmatprep.subr.mxu0 0.0
    %236 = vmatpush1.xpose.msra.mxu0 0.0
    %237 = vmatprep.subr.mxu0 0.0
    %238 = vmatpush1.xpose.msra.mxu0 0.0
    %239 = vmatprep.mubr.f32.mxu0 0.0
    %240 = vmatmul.mubr.f32.gmra.mrb[0].mxu0 %v171
    %v241 = vpop.f32.mrb[0].mxu0
    %v242 = vadd.f32 0.0, %v241
    %v243 = vpop.f32.mrb[0].mxu0
    %244 = vdwg.mxu0
    %245 = vrot.lane.b32.xlu0 %v151, 96
    %v246 = vpop.permute.xlu0 %245
    %v247 = vsel %vm170, %v151, 0
    %v249 = vsel %vm170, %v246, 0
    %251 = vmatprep.subr.mxu0 0.0
    %252 = vmatpush1.xpose.msra.mxu0 %v249
    %253 = vmatprep.subr.mxu0 0.0
    %254 = vmatpush1.xpose.msra.mxu0 0.0
    %255 = vmatprep.subr.mxu0 0.0
    %256 = vmatpush1.xpose.msra.mxu0 0.0
    %257 = vmatprep.subr.mxu0 0.0
    %258 = vmatpush1.xpose.msra.mxu0 0.0
    %259 = vmatprep.subr.mxu0 0.0
    %260 = vmatpush1.xpose.msra.mxu0 0.0
    %261 = vmatprep.subr.mxu0 0.0
    %262 = vmatpush1.xpose.msra.mxu0 0.0
    %263 = vmatprep.subr.mxu0 0.0
    %264 = vmatpush1.xpose.msra.mxu0 0.0
    %265 = vmatprep.subr.mxu0 0.0
    %266 = vmatpush1.xpose.msra.mxu0 0.0
    %267 = vmatprep.subr.mxu0 0.0
    %268 = vmatpush1.xpose.msra.mxu0 0.0
    %269 = vmatprep.subr.mxu0 0.0
    %270 = vmatpush1.xpose.msra.mxu0 0.0
    %271 = vmatprep.subr.mxu0 0.0
    %272 = vmatpush1.xpose.msra.mxu0 0.0
    %273 = vmatprep.subr.mxu0 0.0
    %274 = vmatpush1.xpose.msra.mxu0 0.0
    %275 = vmatprep.subr.mxu0 0.0
    %276 = vmatpush1.xpose.msra.mxu0 0.0
    %277 = vmatprep.subr.mxu0 0.0
    %278 = vmatpush1.xpose.msra.mxu0 0.0
    %279 = vmatprep.subr.mxu0 0.0
    %280 = vmatpush1.xpose.msra.mxu0 0.0
    %281 = vmatprep.subr.mxu0 0.0
    %282 = vmatpush1.xpose.msra.mxu0 0.0
    %283 = vmatprep.subr.mxu0 0.0
    %284 = vmatpush1.xpose.msra.mxu0 0.0
    %285 = vmatprep.subr.mxu0 0.0
    %286 = vmatpush1.xpose.msra.mxu0 0.0
    %287 = vmatprep.subr.mxu0 0.0
    %288 = vmatpush1.xpose.msra.mxu0 0.0
    %289 = vmatprep.subr.mxu0 0.0
    %290 = vmatpush1.xpose.msra.mxu0 0.0
    %291 = vmatprep.subr.mxu0 0.0
    %292 = vmatpush1.xpose.msra.mxu0 0.0
    %293 = vmatprep.subr.mxu0 0.0
    %294 = vmatpush1.xpose.msra.mxu0 0.0
    %295 = vmatprep.subr.mxu0 0.0
    %296 = vmatpush1.xpose.msra.mxu0 0.0
    %297 = vmatprep.subr.mxu0 0.0
    %298 = vmatpush1.xpose.msra.mxu0 0.0
    %299 = vmatprep.subr.mxu0 0.0
    %300 = vmatpush1.xpose.msra.mxu0 0.0
    %301 = vmatprep.subr.mxu0 0.0
    %302 = vmatpush1.xpose.msra.mxu0 0.0
    %303 = vmatprep.subr.mxu0 0.0
    %304 = vmatpush1.xpose.msra.mxu0 0.0
    %305 = vmatprep.subr.mxu0 0.0
    %306 = vmatpush1.xpose.msra.mxu0 0.0
    %307 = vmatprep.subr.mxu0 0.0
    %308 = vmatpush1.xpose.msra.mxu0 0.0
    %309 = vmatprep.subr.mxu0 0.0
    %310 = vmatpush1.xpose.msra.mxu0 0.0
    %311 = vmatprep.subr.mxu0 0.0
    %312 = vmatpush1.xpose.msra.mxu0 0.0
    %313 = vmatprep.subr.mxu0 0.0
    %314 = vmatpush1.xpose.msra.mxu0 0.0
    %315 = vmatprep.mubr.f32.mxu0 0.0
    %316 = vmatmul.mubr.f32.gmra.mrb[0].mxu0 %v247
    %v317 = vpop.f32.mrb[0].mxu0
    %v318 = vadd.f32 0.0, %v317
    %v319 = vpop.f32.mrb[0].mxu0
    %320 = vdwg.mxu0
    %321 = vrot.lane.b32.xlu0 %v157, 96
    %v322 = vpop.permute.xlu0 %321
    %v323 = vsel %vm170, %v157, 0
    %v325 = vsel %vm170, %v322, 0
    %327 = vmatprep.subr.mxu0 0.0
    %328 = vmatpush1.xpose.msra.mxu0 %v325
    %329 = vmatprep.subr.mxu0 0.0
    %330 = vmatpush1.xpose.msra.mxu0 0.0
    %331 = vmatprep.subr.mxu0 0.0
    %332 = vmatpush1.xpose.msra.mxu0 0.0
    %333 = vmatprep.subr.mxu0 0.0
    %334 = vmatpush1.xpose.msra.mxu0 0.0
    %335 = vmatprep.subr.mxu0 0.0
    %336 = vmatpush1.xpose.msra.mxu0 0.0
    %337 = vmatprep.subr.mxu0 0.0
    %338 = vmatpush1.xpose.msra.mxu0 0.0
    %339 = vmatprep.subr.mxu0 0.0
    %340 = vmatpush1.xpose.msra.mxu0 0.0
    %341 = vmatprep.subr.mxu0 0.0
    %342 = vmatpush1.xpose.msra.mxu0 0.0
    %343 = vmatprep.subr.mxu0 0.0
    %344 = vmatpush1.xpose.msra.mxu0 0.0
    %345 = vmatprep.subr.mxu0 0.0
    %346 = vmatpush1.xpose.msra.mxu0 0.0
    %347 = vmatprep.subr.mxu0 0.0
    %348 = vmatpush1.xpose.msra.mxu0 0.0
    %349 = vmatprep.subr.mxu0 0.0
    %350 = vmatpush1.xpose.msra.mxu0 0.0
    %351 = vmatprep.subr.mxu0 0.0
    %352 = vmatpush1.xpose.msra.mxu0 0.0
    %353 = vmatprep.subr.mxu0 0.0
    %354 = vmatpush1.xpose.msra.mxu0 0.0
    %355 = vmatprep.subr.mxu0 0.0
    %356 = vmatpush1.xpose.msra.mxu0 0.0
    %357 = vmatprep.subr.mxu0 0.0
    %358 = vmatpush1.xpose.msra.mxu0 0.0
    %359 = vmatprep.subr.mxu0 0.0
    %360 = vmatpush1.xpose.msra.mxu0 0.0
    %361 = vmatprep.subr.mxu0 0.0
    %362 = vmatpush1.xpose.msra.mxu0 0.0
    %363 = vmatprep.subr.mxu0 0.0
    %364 = vmatpush1.xpose.msra.mxu0 0.0
    %365 = vmatprep.subr.mxu0 0.0
    %366 = vmatpush1.xpose.msra.mxu0 0.0
    %367 = vmatprep.subr.mxu0 0.0
    %368 = vmatpush1.xpose.msra.mxu0 0.0
    %369 = vmatprep.subr.mxu0 0.0
    %370 = vmatpush1.xpose.msra.mxu0 0.0
    %371 = vmatprep.subr.mxu0 0.0
    %372 = vmatpush1.xpose.msra.mxu0 0.0
    %373 = vmatprep.subr.mxu0 0.0
    %374 = vmatpush1.xpose.msra.mxu0 0.0
    %375 = vmatprep.subr.mxu0 0.0
    %376 = vmatpush1.xpose.msra.mxu0 0.0
    %377 = vmatprep.subr.mxu0 0.0
    %378 = vmatpush1.xpose.msra.mxu0 0.0
    %379 = vmatprep.subr.mxu0 0.0
    %380 = vmatpush1.xpose.msra.mxu0 0.0
    %381 = vmatprep.subr.mxu0 0.0
    %382 = vmatpush1.xpose.msra.mxu0 0.0
    %383 = vmatprep.subr.mxu0 0.0
    %384 = vmatpush1.xpose.msra.mxu0 0.0
    %385 = vmatprep.subr.mxu0 0.0
    %386 = vmatpush1.xpose.msra.mxu0 0.0
    %387 = vmatprep.subr.mxu0 0.0
    %388 = vmatpush1.xpose.msra.mxu0 0.0
    %389 = vmatprep.subr.mxu0 0.0
    %390 = vmatpush1.xpose.msra.mxu0 0.0
    %391 = vmatprep.mubr.f32.mxu0 0.0
    %392 = vmatmul.mubr.f32.gmra.mrb[0].mxu0 %v323
    %v393 = vpop.f32.mrb[0].mxu0
    %v394 = vadd.f32 0.0, %v393
    %v395 = vpop.f32.mrb[0].mxu0
    %396 = vdwg.mxu0
    %397 = vrot.lane.b32.xlu0 %v159, 96
    %v398 = vpop.permute.xlu0 %397
    %v399 = vsel %vm170, %v159, 0
    %v401 = vsel %vm170, %v398, 0
    %403 = vmatprep.subr.mxu0 0.0
    %404 = vmatpush1.xpose.msra.mxu0 %v401
    %405 = vmatprep.subr.mxu0 0.0
    %406 = vmatpush1.xpose.msra.mxu0 0.0
    %407 = vmatprep.subr.mxu0 0.0
    %408 = vmatpush1.xpose.msra.mxu0 0.0
    %409 = vmatprep.subr.mxu0 0.0
    %410 = vmatpush1.xpose.msra.mxu0 0.0
    %411 = vmatprep.subr.mxu0 0.0
    %412 = vmatpush1.xpose.msra.mxu0 0.0
    %413 = vmatprep.subr.mxu0 0.0
    %414 = vmatpush1.xpose.msra.mxu0 0.0
    %415 = vmatprep.subr.mxu0 0.0
    %416 = vmatpush1.xpose.msra.mxu0 0.0
    %417 = vmatprep.subr.mxu0 0.0
    %418 = vmatpush1.xpose.msra.mxu0 0.0
    %419 = vmatprep.subr.mxu0 0.0
    %420 = vmatpush1.xpose.msra.mxu0 0.0
    %421 = vmatprep.subr.mxu0 0.0
    %422 = vmatpush1.xpose.msra.mxu0 0.0
    %423 = vmatprep.subr.mxu0 0.0
    %424 = vmatpush1.xpose.msra.mxu0 0.0
    %425 = vmatprep.subr.mxu0 0.0
    %426 = vmatpush1.xpose.msra.mxu0 0.0
    %427 = vmatprep.subr.mxu0 0.0
    %428 = vmatpush1.xpose.msra.mxu0 0.0
    %429 = vmatprep.subr.mxu0 0.0
    %430 = vmatpush1.xpose.msra.mxu0 0.0
    %431 = vmatprep.subr.mxu0 0.0
    %432 = vmatpush1.xpose.msra.mxu0 0.0
    %433 = vmatprep.subr.mxu0 0.0
    %434 = vmatpush1.xpose.msra.mxu0 0.0
    %435 = vmatprep.subr.mxu0 0.0
    %436 = vmatpush1.xpose.msra.mxu0 0.0
    %437 = vmatprep.subr.mxu0 0.0
    %438 = vmatpush1.xpose.msra.mxu0 0.0
    %439 = vmatprep.subr.mxu0 0.0
    %440 = vmatpush1.xpose.msra.mxu0 0.0
    %441 = vmatprep.subr.mxu0 0.0
    %442 = vmatpush1.xpose.msra.mxu0 0.0
    %443 = vmatprep.subr.mxu0 0.0
    %444 = vmatpush1.xpose.msra.mxu0 0.0
    %445 = vmatprep.subr.mxu0 0.0
    %446 = vmatpush1.xpose.msra.mxu0 0.0
    %447 = vmatprep.subr.mxu0 0.0
    %448 = vmatpush1.xpose.msra.mxu0 0.0
    %449 = vmatprep.subr.mxu0 0.0
    %450 = vmatpush1.xpose.msra.mxu0 0.0
    %451 = vmatprep.subr.mxu0 0.0
    %452 = vmatpush1.xpose.msra.mxu0 0.0
    %453 = vmatprep.subr.mxu0 0.0
    %454 = vmatpush1.xpose.msra.mxu0 0.0
    %455 = vmatprep.subr.mxu0 0.0
    %456 = vmatpush1.xpose.msra.mxu0 0.0
    %457 = vmatprep.subr.mxu0 0.0
    %458 = vmatpush1.xpose.msra.mxu0 0.0
    %459 = vmatprep.subr.mxu0 0.0
    %460 = vmatpush1.xpose.msra.mxu0 0.0
    %461 = vmatprep.subr.mxu0 0.0
    %462 = vmatpush1.xpose.msra.mxu0 0.0
    %463 = vmatprep.subr.mxu0 0.0
    %464 = vmatpush1.xpose.msra.mxu0 0.0
    %465 = vmatprep.subr.mxu0 0.0
    %466 = vmatpush1.xpose.msra.mxu0 0.0
    %467 = vmatprep.mubr.f32.mxu0 0.0
    %468 = vmatmul.mubr.f32.gmra.mrb[0].mxu0 %v399
    %v469 = vpop.f32.mrb[0].mxu0
    %v470 = vadd.f32 0.0, %v469
    %v471 = vpop.f32.mrb[0].mxu0
    %472 = vdwg.mxu0
    %473 = vrot.lane.b32.xlu0 %v161, 96
    %v474 = vpop.permute.xlu0 %473
    %v475 = vsel %vm170, %v161, 0
    %v477 = vsel %vm170, %v474, 0
    %479 = vmatprep.subr.mxu0 0.0
    %480 = vmatpush1.xpose.msra.mxu0 %v477
    %481 = vmatprep.subr.mxu0 0.0
    %482 = vmatpush1.xpose.msra.mxu0 0.0
    %483 = vmatprep.subr.mxu0 0.0
    %484 = vmatpush1.xpose.msra.mxu0 0.0
    %485 = vmatprep.subr.mxu0 0.0
    %486 = vmatpush1.xpose.msra.mxu0 0.0
    %487 = vmatprep.subr.mxu0 0.0
    %488 = vmatpush1.xpose.msra.mxu0 0.0
    %489 = vmatprep.subr.mxu0 0.0
    %490 = vmatpush1.xpose.msra.mxu0 0.0
    %491 = vmatprep.subr.mxu0 0.0
    %492 = vmatpush1.xpose.msra.mxu0 0.0
    %493 = vmatprep.subr.mxu0 0.0
    %494 = vmatpush1.xpose.msra.mxu0 0.0
    %495 = vmatprep.subr.mxu0 0.0
    %496 = vmatpush1.xpose.msra.mxu0 0.0
    %497 = vmatprep.subr.mxu0 0.0
    %498 = vmatpush1.xpose.msra.mxu0 0.0
    %499 = vmatprep.subr.mxu0 0.0
    %500 = vmatpush1.xpose.msra.mxu0 0.0
    %501 = vmatprep.subr.mxu0 0.0
    %502 = vmatpush1.xpose.msra.mxu0 0.0
    %503 = vmatprep.subr.mxu0 0.0
    %504 = vmatpush1.xpose.msra.mxu0 0.0
    %505 = vmatprep.subr.mxu0 0.0
    %506 = vmatpush1.xpose.msra.mxu0 0.0
    %507 = vmatprep.subr.mxu0 0.0
    %508 = vmatpush1.xpose.msra.mxu0 0.0
    %509 = vmatprep.subr.mxu0 0.0
    %510 = vmatpush1.xpose.msra.mxu0 0.0
    %511 = vmatprep.subr.mxu0 0.0
    %512 = vmatpush1.xpose.msra.mxu0 0.0
    %513 = vmatprep.subr.mxu0 0.0
    %514 = vmatpush1.xpose.msra.mxu0 0.0
    %515 = vmatprep.subr.mxu0 0.0
    %516 = vmatpush1.xpose.msra.mxu0 0.0
    %517 = vmatprep.subr.mxu0 0.0
    %518 = vmatpush1.xpose.msra.mxu0 0.0
    %519 = vmatprep.subr.mxu0 0.0
    %520 = vmatpush1.xpose.msra.mxu0 0.0
    %521 = vmatprep.subr.mxu0 0.0
    %522 = vmatpush1.xpose.msra.mxu0 0.0
    %523 = vmatprep.subr.mxu0 0.0
    %524 = vmatpush1.xpose.msra.mxu0 0.0
    %525 = vmatprep.subr.mxu0 0.0
    %526 = vmatpush1.xpose.msra.mxu0 0.0
    %527 = vmatprep.subr.mxu0 0.0
    %528 = vmatpush1.xpose.msra.mxu0 0.0
    %529 = vmatprep.subr.mxu0 0.0
    %530 = vmatpush1.xpose.msra.mxu0 0.0
    %531 = vmatprep.subr.mxu0 0.0
    %532 = vmatpush1.xpose.msra.mxu0 0.0
    %533 = vmatprep.subr.mxu0 0.0
    %534 = vmatpush1.xpose.msra.mxu0 0.0
    %535 = vmatprep.subr.mxu0 0.0
    %536 = vmatpush1.xpose.msra.mxu0 0.0
    %537 = vmatprep.subr.mxu0 0.0
    %538 = vmatpush1.xpose.msra.mxu0 0.0
    %539 = vmatprep.subr.mxu0 0.0
    %540 = vmatpush1.xpose.msra.mxu0 0.0
    %541 = vmatprep.subr.mxu0 0.0
    %542 = vmatpush1.xpose.msra.mxu0 0.0
    %543 = vmatprep.mubr.f32.mxu0 0.0
    %544 = vmatmul.mubr.f32.gmra.mrb[0].mxu0 %v475
    %v545 = vpop.f32.mrb[0].mxu0
    %v546 = vadd.f32 0.0, %v545
    %v547 = vpop.f32.mrb[0].mxu0
    %548 = vdwg.mxu0
    %549 = vrot.lane.b32.xlu0 %v163, 96
    %v550 = vpop.permute.xlu0 %549
    %v551 = vsel %vm170, %v163, 0
    %v553 = vsel %vm170, %v550, 0
    %555 = vmatprep.subr.mxu0 0.0
    %556 = vmatpush1.xpose.msra.mxu0 %v553
    %557 = vmatprep.subr.mxu0 0.0
    %558 = vmatpush1.xpose.msra.mxu0 0.0
    %559 = vmatprep.subr.mxu0 0.0
    %560 = vmatpush1.xpose.msra.mxu0 0.0
    %561 = vmatprep.subr.mxu0 0.0
    %562 = vmatpush1.xpose.msra.mxu0 0.0
    %563 = vmatprep.subr.mxu0 0.0
    %564 = vmatpush1.xpose.msra.mxu0 0.0
    %565 = vmatprep.subr.mxu0 0.0
    %566 = vmatpush1.xpose.msra.mxu0 0.0
    %567 = vmatprep.subr.mxu0 0.0
    %568 = vmatpush1.xpose.msra.mxu0 0.0
    %569 = vmatprep.subr.mxu0 0.0
    %570 = vmatpush1.xpose.msra.mxu0 0.0
    %571 = vmatprep.subr.mxu0 0.0
    %572 = vmatpush1.xpose.msra.mxu0 0.0
    %573 = vmatprep.subr.mxu0 0.0
    %574 = vmatpush1.xpose.msra.mxu0 0.0
    %575 = vmatprep.subr.mxu0 0.0
    %576 = vmatpush1.xpose.msra.mxu0 0.0
    %577 = vmatprep.subr.mxu0 0.0
    %578 = vmatpush1.xpose.msra.mxu0 0.0
    %579 = vmatprep.subr.mxu0 0.0
    %580 = vmatpush1.xpose.msra.mxu0 0.0
    %581 = vmatprep.subr.mxu0 0.0
    %582 = vmatpush1.xpose.msra.mxu0 0.0
    %583 = vmatprep.subr.mxu0 0.0
    %584 = vmatpush1.xpose.msra.mxu0 0.0
    %585 = vmatprep.subr.mxu0 0.0
    %586 = vmatpush1.xpose.msra.mxu0 0.0
    %587 = vmatprep.subr.mxu0 0.0
    %588 = vmatpush1.xpose.msra.mxu0 0.0
    %589 = vmatprep.subr.mxu0 0.0
    %590 = vmatpush1.xpose.msra.mxu0 0.0
    %591 = vmatprep.subr.mxu0 0.0
    %592 = vmatpush1.xpose.msra.mxu0 0.0
    %593 = vmatprep.subr.mxu0 0.0
    %594 = vmatpush1.xpose.msra.mxu0 0.0
    %595 = vmatprep.subr.mxu0 0.0
    %596 = vmatpush1.xpose.msra.mxu0 0.0
    %597 = vmatprep.subr.mxu0 0.0
    %598 = vmatpush1.xpose.msra.mxu0 0.0
    %599 = vmatprep.subr.mxu0 0.0
    %600 = vmatpush1.xpose.msra.mxu0 0.0
    %601 = vmatprep.subr.mxu0 0.0
    %602 = vmatpush1.xpose.msra.mxu0 0.0
    %603 = vmatprep.subr.mxu0 0.0
    %604 = vmatpush1.xpose.msra.mxu0 0.0
    %605 = vmatprep.subr.mxu0 0.0
    %606 = vmatpush1.xpose.msra.mxu0 0.0
    %607 = vmatprep.subr.mxu0 0.0
    %608 = vmatpush1.xpose.msra.mxu0 0.0
    %609 = vmatprep.subr.mxu0 0.0
    %610 = vmatpush1.xpose.msra.mxu0 0.0
    %611 = vmatprep.subr.mxu0 0.0
    %612 = vmatpush1.xpose.msra.mxu0 0.0
    %613 = vmatprep.subr.mxu0 0.0
    %614 = vmatpush1.xpose.msra.mxu0 0.0
    %615 = vmatprep.subr.mxu0 0.0
    %616 = vmatpush1.xpose.msra.mxu0 0.0
    %617 = vmatprep.subr.mxu0 0.0
    %618 = vmatpush1.xpose.msra.mxu0 0.0
    %619 = vmatprep.mubr.f32.mxu0 0.0
    %620 = vmatmul.mubr.f32.gmra.mrb[0].mxu0 %v551
    %v621 = vpop.f32.mrb[0].mxu0
    %v622 = vadd.f32 0.0, %v621
    %v623 = vpop.f32.mrb[0].mxu0
    %624 = vdwg.mxu0
    %625 = vrot.lane.b32.xlu0 %v165, 96
    %v626 = vpop.permute.xlu0 %625
    %v627 = vsel %vm170, %v165, 0
    %v629 = vsel %vm170, %v626, 0
    %631 = vmatprep.subr.mxu0 0.0
    %632 = vmatpush1.xpose.msra.mxu0 %v629
    %633 = vmatprep.subr.mxu0 0.0
    %634 = vmatpush1.xpose.msra.mxu0 0.0
    %635 = vmatprep.subr.mxu0 0.0
    %636 = vmatpush1.xpose.msra.mxu0 0.0
    %637 = vmatprep.subr.mxu0 0.0
    %638 = vmatpush1.xpose.msra.mxu0 0.0
    %639 = vmatprep.subr.mxu0 0.0
    %640 = vmatpush1.xpose.msra.mxu0 0.0
    %641 = vmatprep.subr.mxu0 0.0
    %642 = vmatpush1.xpose.msra.mxu0 0.0
    %643 = vmatprep.subr.mxu0 0.0
    %644 = vmatpush1.xpose.msra.mxu0 0.0
    %645 = vmatprep.subr.mxu0 0.0
    %646 = vmatpush1.xpose.msra.mxu0 0.0
    %647 = vmatprep.subr.mxu0 0.0
    %648 = vmatpush1.xpose.msra.mxu0 0.0
    %649 = vmatprep.subr.mxu0 0.0
    %650 = vmatpush1.xpose.msra.mxu0 0.0
    %651 = vmatprep.subr.mxu0 0.0
    %652 = vmatpush1.xpose.msra.mxu0 0.0
    %653 = vmatprep.subr.mxu0 0.0
    %654 = vmatpush1.xpose.msra.mxu0 0.0
    %655 = vmatprep.subr.mxu0 0.0
    %656 = vmatpush1.xpose.msra.mxu0 0.0
    %657 = vmatprep.subr.mxu0 0.0
    %658 = vmatpush1.xpose.msra.mxu0 0.0
    %659 = vmatprep.subr.mxu0 0.0
    %660 = vmatpush1.xpose.msra.mxu0 0.0
    %661 = vmatprep.subr.mxu0 0.0
    %662 = vmatpush1.xpose.msra.mxu0 0.0
    %663 = vmatprep.subr.mxu0 0.0
    %664 = vmatpush1.xpose.msra.mxu0 0.0
    %665 = vmatprep.subr.mxu0 0.0
    %666 = vmatpush1.xpose.msra.mxu0 0.0
    %667 = vmatprep.subr.mxu0 0.0
    %668 = vmatpush1.xpose.msra.mxu0 0.0
    %669 = vmatprep.subr.mxu0 0.0
    %670 = vmatpush1.xpose.msra.mxu0 0.0
    %671 = vmatprep.subr.mxu0 0.0
    %672 = vmatpush1.xpose.msra.mxu0 0.0
    %673 = vmatprep.subr.mxu0 0.0
    %674 = vmatpush1.xpose.msra.mxu0 0.0
    %675 = vmatprep.subr.mxu0 0.0
    %676 = vmatpush1.xpose.msra.mxu0 0.0
    %677 = vmatprep.subr.mxu0 0.0
    %678 = vmatpush1.xpose.msra.mxu0 0.0
    %679 = vmatprep.subr.mxu0 0.0
    %680 = vmatpush1.xpose.msra.mxu0 0.0
    %681 = vmatprep.subr.mxu0 0.0
    %682 = vmatpush1.xpose.msra.mxu0 0.0
    %683 = vmatprep.subr.mxu0 0.0
    %684 = vmatpush1.xpose.msra.mxu0 0.0
    %685 = vmatprep.subr.mxu0 0.0
    %686 = vmatpush1.xpose.msra.mxu0 0.0
    %687 = vmatprep.subr.mxu0 0.0
    %688 = vmatpush1.xpose.msra.mxu0 0.0
    %689 = vmatprep.subr.mxu0 0.0
    %690 = vmatpush1.xpose.msra.mxu0 0.0
    %691 = vmatprep.subr.mxu0 0.0
    %692 = vmatpush1.xpose.msra.mxu0 0.0
    %693 = vmatprep.subr.mxu0 0.0
    %694 = vmatpush1.xpose.msra.mxu0 0.0
    %695 = vmatprep.mubr.f32.mxu0 0.0
    %696 = vmatmul.mubr.f32.gmra.mrb[0].mxu0 %v627
    %v697 = vpop.f32.mrb[0].mxu0
    %v698 = vadd.f32 0.0, %v697
    %v699 = vpop.f32.mrb[0].mxu0
    %700 = vdwg.mxu0
    %701 = vrot.lane.b32.xlu0 %v167, 96
    %v702 = vpop.permute.xlu0 %701
    %v703 = vsel %vm170, %v167, 0
    %v705 = vsel %vm170, %v702, 0
    %707 = vmatprep.subr.mxu0 0.0
    %708 = vmatpush1.xpose.msra.mxu0 %v705
    %709 = vmatprep.subr.mxu0 0.0
    %710 = vmatpush1.xpose.msra.mxu0 0.0
    %711 = vmatprep.subr.mxu0 0.0
    %712 = vmatpush1.xpose.msra.mxu0 0.0
    %713 = vmatprep.subr.mxu0 0.0
    %714 = vmatpush1.xpose.msra.mxu0 0.0
    %715 = vmatprep.subr.mxu0 0.0
    %716 = vmatpush1.xpose.msra.mxu0 0.0
    %717 = vmatprep.subr.mxu0 0.0
    %718 = vmatpush1.xpose.msra.mxu0 0.0
    %719 = vmatprep.subr.mxu0 0.0
    %720 = vmatpush1.xpose.msra.mxu0 0.0
    %721 = vmatprep.subr.mxu0 0.0
    %722 = vmatpush1.xpose.msra.mxu0 0.0
    %723 = vmatprep.subr.mxu0 0.0
    %724 = vmatpush1.xpose.msra.mxu0 0.0
    %725 = vmatprep.subr.mxu0 0.0
    %726 = vmatpush1.xpose.msra.mxu0 0.0
    %727 = vmatprep.subr.mxu0 0.0
    %728 = vmatpush1.xpose.msra.mxu0 0.0
    %729 = vmatprep.subr.mxu0 0.0
    %730 = vmatpush1.xpose.msra.mxu0 0.0
    %731 = vmatprep.subr.mxu0 0.0
    %732 = vmatpush1.xpose.msra.mxu0 0.0
    %733 = vmatprep.subr.mxu0 0.0
    %734 = vmatpush1.xpose.msra.mxu0 0.0
    %735 = vmatprep.subr.mxu0 0.0
    %736 = vmatpush1.xpose.msra.mxu0 0.0
    %737 = vmatprep.subr.mxu0 0.0
    %738 = vmatpush1.xpose.msra.mxu0 0.0
    %739 = vmatprep.subr.mxu0 0.0
    %740 = vmatpush1.xpose.msra.mxu0 0.0
    %741 = vmatprep.subr.mxu0 0.0
    %742 = vmatpush1.xpose.msra.mxu0 0.0
    %743 = vmatprep.subr.mxu0 0.0
    %744 = vmatpush1.xpose.msra.mxu0 0.0
    %745 = vmatprep.subr.mxu0 0.0
    %746 = vmatpush1.xpose.msra.mxu0 0.0
    %747 = vmatprep.subr.mxu0 0.0
    %748 = vmatpush1.xpose.msra.mxu0 0.0
    %749 = vmatprep.subr.mxu0 0.0
    %750 = vmatpush1.xpose.msra.mxu0 0.0
    %751 = vmatprep.subr.mxu0 0.0
    %752 = vmatpush1.xpose.msra.mxu0 0.0
    %753 = vmatprep.subr.mxu0 0.0
    %754 = vmatpush1.xpose.msra.mxu0 0.0
    %755 = vmatprep.subr.mxu0 0.0
    %756 = vmatpush1.xpose.msra.mxu0 0.0
    %757 = vmatprep.subr.mxu0 0.0
    %758 = vmatpush1.xpose.msra.mxu0 0.0
    %759 = vmatprep.subr.mxu0 0.0
    %760 = vmatpush1.xpose.msra.mxu0 0.0
    %761 = vmatprep.subr.mxu0 0.0
    %762 = vmatpush1.xpose.msra.mxu0 0.0
    %763 = vmatprep.subr.mxu0 0.0
    %764 = vmatpush1.xpose.msra.mxu0 0.0
    %765 = vmatprep.subr.mxu0 0.0
    %766 = vmatpush1.xpose.msra.mxu0 0.0
    %767 = vmatprep.subr.mxu0 0.0
    %768 = vmatpush1.xpose.msra.mxu0 0.0
    %769 = vmatprep.subr.mxu0 0.0
    %770 = vmatpush1.xpose.msra.mxu0 0.0
    %771 = vmatprep.mubr.f32.mxu0 0.0
    %772 = vmatmul.mubr.f32.gmra.mrb[0].mxu0 %v703
    %v773 = vpop.f32.mrb[0].mxu0
    %v774 = vadd.f32 0.0, %v773
    %v775 = vpop.f32.mrb[0].mxu0
    %776 = vdwg.mxu0
    %v777 = vmul.f32 %v242, 0.35355338
    %v778 = vmul.f32 %v318, 0.35355338
    %v779 = vmul.f32 %v394, 0.35355338
    %v780 = vmul.f32 %v470, 0.35355338
    %v781 = vmul.f32 %v546, 0.35355338
    %v782 = vmul.f32 %v622, 0.35355338
    %v783 = vmul.f32 %v698, 0.35355338
    %v784 = vmul.f32 %v774, 0.35355338
    %v785 = vlaneseq
    %v786 = vshrl.u32 %v785, 7
    %v787 = vlaneseq
    %v788 = vand.u32 %v787, 127
    %vm789 = vcmp.le.s32.totalorder %v788, %v786
    %v790 = vsel %vm789, 1, 0
    %vm791 = vcmp.eq.s32.totalorder %v790, 1
    %v792 = vsel %vm791, %v777, -10000.0
    %v793 = vsel %vm791, %v778, -10000.0
    %v794 = vsel %vm791, %v779, -10000.0
    %v795 = vsel %vm791, %v780, -10000.0
    %v796 = vsel %vm791, %v781, -10000.0
    %v797 = vsel %vm791, %v782, -10000.0
    %v798 = vsel %vm791, %v783, -10000.0
    %v799 = vsel %vm791, %v784, -10000.0
    %v800 = vsel %vm170, %v792, -inf
    %801 = vmax.xlane.f32.xlu0 %v800
    %v802 = vpop.xlane.xlu0 %801
    %v803 = vsel %vm170, %v793, -inf
    %804 = vmax.xlane.f32.xlu0 %v803
    %v805 = vpop.xlane.xlu0 %804
    %v806 = vsel %vm170, %v794, -inf
    %807 = vmax.xlane.f32.xlu0 %v806
    %v808 = vpop.xlane.xlu0 %807
    %v809 = vsel %vm170, %v795, -inf
    %810 = vmax.xlane.f32.xlu0 %v809
    %v811 = vpop.xlane.xlu0 %810
    %v812 = vsel %vm170, %v796, -inf
    %813 = vmax.xlane.f32.xlu0 %v812
    %v814 = vpop.xlane.xlu0 %813
    %v815 = vsel %vm170, %v797, -inf
    %816 = vmax.xlane.f32.xlu0 %v815
    %v817 = vpop.xlane.xlu0 %816
    %v818 = vsel %vm170, %v798, -inf
    %819 = vmax.xlane.f32.xlu0 %v818
    %v820 = vpop.xlane.xlu0 %819
    %v821 = vsel %vm170, %v799, -inf
    %822 = vmax.xlane.f32.xlu0 %v821
    %v823 = vpop.xlane.xlu0 %822
    %v824 = vsub.f32 %v792, %v802
    %v825 = vsub.f32 %v793, %v805
    %v826 = vsub.f32 %v794, %v808
    %v827 = vsub.f32 %v795, %v811
    %v828 = vsub.f32 %v796, %v814
    %v829 = vsub.f32 %v797, %v817
    %v830 = vsub.f32 %v798, %v820
    %v831 = vsub.f32 %v799, %v823
    %v832 = vmul.f32 %v824, 1.442695
    %v833 = vpow.pop %v832
    %v834 = vmul.f32 %v825, 1.442695
    %v835 = vpow.pop %v834
    %v836 = vmul.f32 %v826, 1.442695
    %v837 = vpow.pop %v836
    %v838 = vmul.f32 %v827, 1.442695
    %v839 = vpow.pop %v838
    %v840 = vmul.f32 %v828, 1.442695
    %v841 = vpow.pop %v840
    %v842 = vmul.f32 %v829, 1.442695
    %v843 = vpow.pop %v842
    %v844 = vmul.f32 %v830, 1.442695
    %v845 = vpow.pop %v844
    %v846 = vmul.f32 %v831, 1.442695
    %v847 = vpow.pop %v846
    %v848 = vsel %vm170, %v833, 0.0
    %849 = vadd.xlane.f32.xlu0 %v848
    %v850 = vpop.xlane.xlu0 %849
    %v851 = vsel %vm170, %v835, 0.0
    %852 = vadd.xlane.f32.xlu0 %v851
    %v853 = vpop.xlane.xlu0 %852
    %v854 = vsel %vm170, %v837, 0.0
    %855 = vadd.xlane.f32.xlu0 %v854
    %v856 = vpop.xlane.xlu0 %855
    %v857 = vsel %vm170, %v839, 0.0
    %858 = vadd.xlane.f32.xlu0 %v857
    %v859 = vpop.xlane.xlu0 %858
    %v860 = vsel %vm170, %v841, 0.0
    %861 = vadd.xlane.f32.xlu0 %v860
    %v862 = vpop.xlane.xlu0 %861
    %v863 = vsel %vm170, %v843, 0.0
    %864 = vadd.xlane.f32.xlu0 %v863
    %v865 = vpop.xlane.xlu0 %864
    %v866 = vsel %vm170, %v845, 0.0
    %867 = vadd.xlane.f32.xlu0 %v866
    %v868 = vpop.xlane.xlu0 %867
    %v869 = vsel %vm170, %v847, 0.0
    %870 = vadd.xlane.f32.xlu0 %v869
    %v871 = vpop.xlane.xlu0 %870
    %v872 = vrcp.pop %v850
    %v873 = vrcp.pop %v853
    %v874 = vrcp.pop %v856
    %v875 = vrcp.pop %v859
    %v876 = vrcp.pop %v862
    %v877 = vrcp.pop %v865
    %v878 = vrcp.pop %v868
    %v879 = vrcp.pop %v871
    %v880 = vmul.f32 %v833, %v872
    %v881 = vmul.f32 %v835, %v873
    %v882 = vmul.f32 %v837, %v874
    %v883 = vmul.f32 %v839, %v875
    %v884 = vmul.f32 %v841, %v876
    %v885 = vmul.f32 %v843, %v877
    %v886 = vmul.f32 %v845, %v878
    %v887 = vmul.f32 %v847, %v879
    %888 = vrot.lane.b32.xlu0 %v146, 64
    %v889 = vpop.permute.xlu0 %888
    %v892 = vsel %vm170, %v880, 0
    %894 = vmatprep.subr.mxu0 0.0
    %895 = vmatpush1.msra.mxu0 %v889
    %896 = vmatprep.subr.mxu0 0.0
    %897 = vmatpush1.msra.mxu0 0.0
    %898 = vmatprep.subr.mxu0 0.0
    %899 = vmatpush1.msra.mxu0 0.0
    %900 = vmatprep.subr.mxu0 0.0
    %901 = vmatpush1.msra.mxu0 0.0
    %902 = vmatprep.subr.mxu0 0.0
    %903 = vmatpush1.msra.mxu0 0.0
    %904 = vmatprep.subr.mxu0 0.0
    %905 = vmatpush1.msra.mxu0 0.0
    %906 = vmatprep.subr.mxu0 0.0
    %907 = vmatpush1.msra.mxu0 0.0
    %908 = vmatprep.subr.mxu0 0.0
    %909 = vmatpush1.msra.mxu0 0.0
    %910 = vmatprep.subr.mxu0 0.0
    %911 = vmatpush1.msra.mxu0 0.0
    %912 = vmatprep.subr.mxu0 0.0
    %913 = vmatpush1.msra.mxu0 0.0
    %914 = vmatprep.subr.mxu0 0.0
    %915 = vmatpush1.msra.mxu0 0.0
    %916 = vmatprep.subr.mxu0 0.0
    %917 = vmatpush1.msra.mxu0 0.0
    %918 = vmatprep.subr.mxu0 0.0
    %919 = vmatpush1.msra.mxu0 0.0
    %920 = vmatprep.subr.mxu0 0.0
    %921 = vmatpush1.msra.mxu0 0.0
    %922 = vmatprep.subr.mxu0 0.0
    %923 = vmatpush1.msra.mxu0 0.0
    %924 = vmatprep.subr.mxu0 0.0
    %925 = vmatpush1.msra.mxu0 0.0
    %926 = vmatprep.subr.mxu0 0.0
    %927 = vmatpush1.msra.mxu0 0.0
    %928 = vmatprep.subr.mxu0 0.0
    %929 = vmatpush1.msra.mxu0 0.0
    %930 = vmatprep.subr.mxu0 0.0
    %931 = vmatpush1.msra.mxu0 0.0
    %932 = vmatprep.subr.mxu0 0.0
    %933 = vmatpush1.msra.mxu0 0.0
    %934 = vmatprep.subr.mxu0 0.0
    %935 = vmatpush1.msra.mxu0 0.0
    %936 = vmatprep.subr.mxu0 0.0
    %937 = vmatpush1.msra.mxu0 0.0
    %938 = vmatprep.subr.mxu0 0.0
    %939 = vmatpush1.msra.mxu0 0.0
    %940 = vmatprep.subr.mxu0 0.0
    %941 = vmatpush1.msra.mxu0 0.0
    %942 = vmatprep.subr.mxu0 0.0
    %943 = vmatpush1.msra.mxu0 0.0
    %944 = vmatprep.subr.mxu0 0.0
    %945 = vmatpush1.msra.mxu0 0.0
    %946 = vmatprep.subr.mxu0 0.0
    %947 = vmatpush1.msra.mxu0 0.0
    %948 = vmatprep.subr.mxu0 0.0
    %949 = vmatpush1.msra.mxu0 0.0
    %950 = vmatprep.subr.mxu0 0.0
    %951 = vmatpush1.msra.mxu0 0.0
    %952 = vmatprep.subr.mxu0 0.0
    %953 = vmatpush1.msra.mxu0 0.0
    %954 = vmatprep.subr.mxu0 0.0
    %955 = vmatpush1.msra.mxu0 0.0
    %956 = vmatprep.subr.mxu0 0.0
    %957 = vmatpush1.msra.mxu0 0.0
    %958 = vmatprep.mubr.f32.mxu0 0.0
    %959 = vmatmul.mubr.f32.gmra.mrb[0].mxu0 %v892
    %v960 = vpop.f32.mrb[0].mxu0
    %v961 = vadd.f32 0.0, %v960
    %v962 = vpop.f32.mrb[0].mxu0
    %963 = vdwg.mxu0
    %964 = vrot.lane.b32.xlu0 %v151, 64
    %v965 = vpop.permute.xlu0 %964
    %v968 = vsel %vm170, %v881, 0
    %970 = vmatprep.subr.mxu0 0.0
    %971 = vmatpush1.msra.mxu0 %v965
    %972 = vmatprep.subr.mxu0 0.0
    %973 = vmatpush1.msra.mxu0 0.0
    %974 = vmatprep.subr.mxu0 0.0
    %975 = vmatpush1.msra.mxu0 0.0
    %976 = vmatprep.subr.mxu0 0.0
    %977 = vmatpush1.msra.mxu0 0.0
    %978 = vmatprep.subr.mxu0 0.0
    %979 = vmatpush1.msra.mxu0 0.0
    %980 = vmatprep.subr.mxu0 0.0
    %981 = vmatpush1.msra.mxu0 0.0
    %982 = vmatprep.subr.mxu0 0.0
    %983 = vmatpush1.msra.mxu0 0.0
    %984 = vmatprep.subr.mxu0 0.0
    %985 = vmatpush1.msra.mxu0 0.0
    %986 = vmatprep.subr.mxu0 0.0
    %987 = vmatpush1.msra.mxu0 0.0
    %988 = vmatprep.subr.mxu0 0.0
    %989 = vmatpush1.msra.mxu0 0.0
    %990 = vmatprep.subr.mxu0 0.0
    %991 = vmatpush1.msra.mxu0 0.0
    %992 = vmatprep.subr.mxu0 0.0
    %993 = vmatpush1.msra.mxu0 0.0
    %994 = vmatprep.subr.mxu0 0.0
    %995 = vmatpush1.msra.mxu0 0.0
    %996 = vmatprep.subr.mxu0 0.0
    %997 = vmatpush1.msra.mxu0 0.0
    %998 = vmatprep.subr.mxu0 0.0
    %999 = vmatpush1.msra.mxu0 0.0
    %1000 = vmatprep.subr.mxu0 0.0
    %1001 = vmatpush1.msra.mxu0 0.0
    %1002 = vmatprep.subr.mxu0 0.0
    %1003 = vmatpush1.msra.mxu0 0.0
    %1004 = vmatprep.subr.mxu0 0.0
    %1005 = vmatpush1.msra.mxu0 0.0
    %1006 = vmatprep.subr.mxu0 0.0
    %1007 = vmatpush1.msra.mxu0 0.0
    %1008 = vmatprep.subr.mxu0 0.0
    %1009 = vmatpush1.msra.mxu0 0.0
    %1010 = vmatprep.subr.mxu0 0.0
    %1011 = vmatpush1.msra.mxu0 0.0
    %1012 = vmatprep.subr.mxu0 0.0
    %1013 = vmatpush1.msra.mxu0 0.0
    %1014 = vmatprep.subr.mxu0 0.0
    %1015 = vmatpush1.msra.mxu0 0.0
    %1016 = vmatprep.subr.mxu0 0.0
    %1017 = vmatpush1.msra.mxu0 0.0
    %1018 = vmatprep.subr.mxu0 0.0
    %1019 = vmatpush1.msra.mxu0 0.0
    %1020 = vmatprep.subr.mxu0 0.0
    %1021 = vmatpush1.msra.mxu0 0.0
    %1022 = vmatprep.subr.mxu0 0.0
    %1023 = vmatpush1.msra.mxu0 0.0
    %1024 = vmatprep.subr.mxu0 0.0
    %1025 = vmatpush1.msra.mxu0 0.0
    %1026 = vmatprep.subr.mxu0 0.0
    %1027 = vmatpush1.msra.mxu0 0.0
    %1028 = vmatprep.subr.mxu0 0.0
    %1029 = vmatpush1.msra.mxu0 0.0
    %1030 = vmatprep.subr.mxu0 0.0
    %1031 = vmatpush1.msra.mxu0 0.0
    %1032 = vmatprep.subr.mxu0 0.0
    %1033 = vmatpush1.msra.mxu0 0.0
    %1034 = vmatprep.mubr.f32.mxu0 0.0
    %1035 = vmatmul.mubr.f32.gmra.mrb[0].mxu0 %v968
    %v1036 = vpop.f32.mrb[0].mxu0
    %v1037 = vadd.f32 0.0, %v1036
    %v1038 = vpop.f32.mrb[0].mxu0
    %1039 = vdwg.mxu0
    %1040 = vrot.lane.b32.xlu0 %v157, 64
    %v1041 = vpop.permute.xlu0 %1040
    %v1044 = vsel %vm170, %v882, 0
    %1046 = vmatprep.subr.mxu0 0.0
    %1047 = vmatpush1.msra.mxu0 %v1041
    %1048 = vmatprep.subr.mxu0 0.0
    %1049 = vmatpush1.msra.mxu0 0.0
    %1050 = vmatprep.subr.mxu0 0.0
    %1051 = vmatpush1.msra.mxu0 0.0
    %1052 = vmatprep.subr.mxu0 0.0
    %1053 = vmatpush1.msra.mxu0 0.0
    %1054 = vmatprep.subr.mxu0 0.0
    %1055 = vmatpush1.msra.mxu0 0.0
    %1056 = vmatprep.subr.mxu0 0.0
    %1057 = vmatpush1.msra.mxu0 0.0
    %1058 = vmatprep.subr.mxu0 0.0
    %1059 = vmatpush1.msra.mxu0 0.0
    %1060 = vmatprep.subr.mxu0 0.0
    %1061 = vmatpush1.msra.mxu0 0.0
    %1062 = vmatprep.subr.mxu0 0.0
    %1063 = vmatpush1.msra.mxu0 0.0
    %1064 = vmatprep.subr.mxu0 0.0
    %1065 = vmatpush1.msra.mxu0 0.0
    %1066 = vmatprep.subr.mxu0 0.0
    %1067 = vmatpush1.msra.mxu0 0.0
    %1068 = vmatprep.subr.mxu0 0.0
    %1069 = vmatpush1.msra.mxu0 0.0
    %1070 = vmatprep.subr.mxu0 0.0
    %1071 = vmatpush1.msra.mxu0 0.0
    %1072 = vmatprep.subr.mxu0 0.0
    %1073 = vmatpush1.msra.mxu0 0.0
    %1074 = vmatprep.subr.mxu0 0.0
    %1075 = vmatpush1.msra.mxu0 0.0
    %1076 = vmatprep.subr.mxu0 0.0
    %1077 = vmatpush1.msra.mxu0 0.0
    %1078 = vmatprep.subr.mxu0 0.0
    %1079 = vmatpush1.msra.mxu0 0.0
    %1080 = vmatprep.subr.mxu0 0.0
    %1081 = vmatpush1.msra.mxu0 0.0
    %1082 = vmatprep.subr.mxu0 0.0
    %1083 = vmatpush1.msra.mxu0 0.0
    %1084 = vmatprep.subr.mxu0 0.0
    %1085 = vmatpush1.msra.mxu0 0.0
    %1086 = vmatprep.subr.mxu0 0.0
    %1087 = vmatpush1.msra.mxu0 0.0
    %1088 = vmatprep.subr.mxu0 0.0
    %1089 = vmatpush1.msra.mxu0 0.0
    %1090 = vmatprep.subr.mxu0 0.0
    %1091 = vmatpush1.msra.mxu0 0.0
    %1092 = vmatprep.subr.mxu0 0.0
    %1093 = vmatpush1.msra.mxu0 0.0
    %1094 = vmatprep.subr.mxu0 0.0
    %1095 = vmatpush1.msra.mxu0 0.0
    %1096 = vmatprep.subr.mxu0 0.0
    %1097 = vmatpush1.msra.mxu0 0.0
    %1098 = vmatprep.subr.mxu0 0.0
    %1099 = vmatpush1.msra.mxu0 0.0
    %1100 = vmatprep.subr.mxu0 0.0
    %1101 = vmatpush1.msra.mxu0 0.0
    %1102 = vmatprep.subr.mxu0 0.0
    %1103 = vmatpush1.msra.mxu0 0.0
    %1104 = vmatprep.subr.mxu0 0.0
    %1105 = vmatpush1.msra.mxu0 0.0
    %1106 = vmatprep.subr.mxu0 0.0
    %1107 = vmatpush1.msra.mxu0 0.0
    %1108 = vmatprep.subr.mxu0 0.0
    %1109 = vmatpush1.msra.mxu0 0.0
    %1110 = vmatprep.mubr.f32.mxu0 0.0
    %1111 = vmatmul.mubr.f32.gmra.mrb[0].mxu0 %v1044
    %v1112 = vpop.f32.mrb[0].mxu0
    %v1113 = vadd.f32 0.0, %v1112
    %v1114 = vpop.f32.mrb[0].mxu0
    %1115 = vdwg.mxu0
    %1116 = vrot.lane.b32.xlu0 %v159, 64
    %v1117 = vpop.permute.xlu0 %1116
    %v1120 = vsel %vm170, %v883, 0
    %1122 = vmatprep.subr.mxu0 0.0
    %1123 = vmatpush1.msra.mxu0 %v1117
    %1124 = vmatprep.subr.mxu0 0.0
    %1125 = vmatpush1.msra.mxu0 0.0
    %1126 = vmatprep.subr.mxu0 0.0
    %1127 = vmatpush1.msra.mxu0 0.0
    %1128 = vmatprep.subr.mxu0 0.0
    %1129 = vmatpush1.msra.mxu0 0.0
    %1130 = vmatprep.subr.mxu0 0.0
    %1131 = vmatpush1.msra.mxu0 0.0
    %1132 = vmatprep.subr.mxu0 0.0
    %1133 = vmatpush1.msra.mxu0 0.0
    %1134 = vmatprep.subr.mxu0 0.0
    %1135 = vmatpush1.msra.mxu0 0.0
    %1136 = vmatprep.subr.mxu0 0.0
    %1137 = vmatpush1.msra.mxu0 0.0
    %1138 = vmatprep.subr.mxu0 0.0
    %1139 = vmatpush1.msra.mxu0 0.0
    %1140 = vmatprep.subr.mxu0 0.0
    %1141 = vmatpush1.msra.mxu0 0.0
    %1142 = vmatprep.subr.mxu0 0.0
    %1143 = vmatpush1.msra.mxu0 0.0
    %1144 = vmatprep.subr.mxu0 0.0
    %1145 = vmatpush1.msra.mxu0 0.0
    %1146 = vmatprep.subr.mxu0 0.0
    %1147 = vmatpush1.msra.mxu0 0.0
    %1148 = vmatprep.subr.mxu0 0.0
    %1149 = vmatpush1.msra.mxu0 0.0
    %1150 = vmatprep.subr.mxu0 0.0
    %1151 = vmatpush1.msra.mxu0 0.0
    %1152 = vmatprep.subr.mxu0 0.0
    %1153 = vmatpush1.msra.mxu0 0.0
    %1154 = vmatprep.subr.mxu0 0.0
    %1155 = vmatpush1.msra.mxu0 0.0
    %1156 = vmatprep.subr.mxu0 0.0
    %1157 = vmatpush1.msra.mxu0 0.0
    %1158 = vmatprep.subr.mxu0 0.0
    %1159 = vmatpush1.msra.mxu0 0.0
    %1160 = vmatprep.subr.mxu0 0.0
    %1161 = vmatpush1.msra.mxu0 0.0
    %1162 = vmatprep.subr.mxu0 0.0
    %1163 = vmatpush1.msra.mxu0 0.0
    %1164 = vmatprep.subr.mxu0 0.0
    %1165 = vmatpush1.msra.mxu0 0.0
    %1166 = vmatprep.subr.mxu0 0.0
    %1167 = vmatpush1.msra.mxu0 0.0
    %1168 = vmatprep.subr.mxu0 0.0
    %1169 = vmatpush1.msra.mxu0 0.0
    %1170 = vmatprep.subr.mxu0 0.0
    %1171 = vmatpush1.msra.mxu0 0.0
    %1172 = vmatprep.subr.mxu0 0.0
    %1173 = vmatpush1.msra.mxu0 0.0
    %1174 = vmatprep.subr.mxu0 0.0
    %1175 = vmatpush1.msra.mxu0 0.0
    %1176 = vmatprep.subr.mxu0 0.0
    %1177 = vmatpush1.msra.mxu0 0.0
    %1178 = vmatprep.subr.mxu0 0.0
    %1179 = vmatpush1.msra.mxu0 0.0
    %1180 = vmatprep.subr.mxu0 0.0
    %1181 = vmatpush1.msra.mxu0 0.0
    %1182 = vmatprep.subr.mxu0 0.0
    %1183 = vmatpush1.msra.mxu0 0.0
    %1184 = vmatprep.subr.mxu0 0.0
    %1185 = vmatpush1.msra.mxu0 0.0
    %1186 = vmatprep.mubr.f32.mxu0 0.0
    %1187 = vmatmul.mubr.f32.gmra.mrb[0].mxu0 %v1120
    %v1188 = vpop.f32.mrb[0].mxu0
    %v1189 = vadd.f32 0.0, %v1188
    %v1190 = vpop.f32.mrb[0].mxu0
    %1191 = vdwg.mxu0
    %1192 = vrot.lane.b32.xlu0 %v161, 64
    %v1193 = vpop.permute.xlu0 %1192
    %v1196 = vsel %vm170, %v884, 0
    %1198 = vmatprep.subr.mxu0 0.0
    %1199 = vmatpush1.msra.mxu0 %v1193
    %1200 = vmatprep.subr.mxu0 0.0
    %1201 = vmatpush1.msra.mxu0 0.0
    %1202 = vmatprep.subr.mxu0 0.0
    %1203 = vmatpush1.msra.mxu0 0.0
    %1204 = vmatprep.subr.mxu0 0.0
    %1205 = vmatpush1.msra.mxu0 0.0
    %1206 = vmatprep.subr.mxu0 0.0
    %1207 = vmatpush1.msra.mxu0 0.0
    %1208 = vmatprep.subr.mxu0 0.0
    %1209 = vmatpush1.msra.mxu0 0.0
    %1210 = vmatprep.subr.mxu0 0.0
    %1211 = vmatpush1.msra.mxu0 0.0
    %1212 = vmatprep.subr.mxu0 0.0
    %1213 = vmatpush1.msra.mxu0 0.0
    %1214 = vmatprep.subr.mxu0 0.0
    %1215 = vmatpush1.msra.mxu0 0.0
    %1216 = vmatprep.subr.mxu0 0.0
    %1217 = vmatpush1.msra.mxu0 0.0
    %1218 = vmatprep.subr.mxu0 0.0
    %1219 = vmatpush1.msra.mxu0 0.0
    %1220 = vmatprep.subr.mxu0 0.0
    %1221 = vmatpush1.msra.mxu0 0.0
    %1222 = vmatprep.subr.mxu0 0.0
    %1223 = vmatpush1.msra.mxu0 0.0
    %1224 = vmatprep.subr.mxu0 0.0
    %1225 = vmatpush1.msra.mxu0 0.0
    %1226 = vmatprep.subr.mxu0 0.0
    %1227 = vmatpush1.msra.mxu0 0.0
    %1228 = vmatprep.subr.mxu0 0.0
    %1229 = vmatpush1.msra.mxu0 0.0
    %1230 = vmatprep.subr.mxu0 0.0
    %1231 = vmatpush1.msra.mxu0 0.0
    %1232 = vmatprep.subr.mxu0 0.0
    %1233 = vmatpush1.msra.mxu0 0.0
    %1234 = vmatprep.subr.mxu0 0.0
    %1235 = vmatpush1.msra.mxu0 0.0
    %1236 = vmatprep.subr.mxu0 0.0
    %1237 = vmatpush1.msra.mxu0 0.0
    %1238 = vmatprep.subr.mxu0 0.0
    %1239 = vmatpush1.msra.mxu0 0.0
    %1240 = vmatprep.subr.mxu0 0.0
    %1241 = vmatpush1.msra.mxu0 0.0
    %1242 = vmatprep.subr.mxu0 0.0
    %1243 = vmatpush1.msra.mxu0 0.0
    %1244 = vmatprep.subr.mxu0 0.0
    %1245 = vmatpush1.msra.mxu0 0.0
    %1246 = vmatprep.subr.mxu0 0.0
    %1247 = vmatpush1.msra.mxu0 0.0
    %1248 = vmatprep.subr.mxu0 0.0
    %1249 = vmatpush1.msra.mxu0 0.0
    %1250 = vmatprep.subr.mxu0 0.0
    %1251 = vmatpush1.msra.mxu0 0.0
    %1252 = vmatprep.subr.mxu0 0.0
    %1253 = vmatpush1.msra.mxu0 0.0
    %1254 = vmatprep.subr.mxu0 0.0
    %1255 = vmatpush1.msra.mxu0 0.0
    %1256 = vmatprep.subr.mxu0 0.0
    %1257 = vmatpush1.msra.mxu0 0.0
    %1258 = vmatprep.subr.mxu0 0.0
    %1259 = vmatpush1.msra.mxu0 0.0
    %1260 = vmatprep.subr.mxu0 0.0
    %1261 = vmatpush1.msra.mxu0 0.0
    %1262 = vmatprep.mubr.f32.mxu0 0.0
    %1263 = vmatmul.mubr.f32.gmra.mrb[0].mxu0 %v1196
    %v1264 = vpop.f32.mrb[0].mxu0
    %v1265 = vadd.f32 0.0, %v1264
    %v1266 = vpop.f32.mrb[0].mxu0
    %1267 = vdwg.mxu0
    %1268 = vrot.lane.b32.xlu0 %v163, 64
    %v1269 = vpop.permute.xlu0 %1268
    %v1272 = vsel %vm170, %v885, 0
    %1274 = vmatprep.subr.mxu0 0.0
    %1275 = vmatpush1.msra.mxu0 %v1269
    %1276 = vmatprep.subr.mxu0 0.0
    %1277 = vmatpush1.msra.mxu0 0.0
    %1278 = vmatprep.subr.mxu0 0.0
    %1279 = vmatpush1.msra.mxu0 0.0
    %1280 = vmatprep.subr.mxu0 0.0
    %1281 = vmatpush1.msra.mxu0 0.0
    %1282 = vmatprep.subr.mxu0 0.0
    %1283 = vmatpush1.msra.mxu0 0.0
    %1284 = vmatprep.subr.mxu0 0.0
    %1285 = vmatpush1.msra.mxu0 0.0
    %1286 = vmatprep.subr.mxu0 0.0
    %1287 = vmatpush1.msra.mxu0 0.0
    %1288 = vmatprep.subr.mxu0 0.0
    %1289 = vmatpush1.msra.mxu0 0.0
    %1290 = vmatprep.subr.mxu0 0.0
    %1291 = vmatpush1.msra.mxu0 0.0
    %1292 = vmatprep.subr.mxu0 0.0
    %1293 = vmatpush1.msra.mxu0 0.0
    %1294 = vmatprep.subr.mxu0 0.0
    %1295 = vmatpush1.msra.mxu0 0.0
    %1296 = vmatprep.subr.mxu0 0.0
    %1297 = vmatpush1.msra.mxu0 0.0
    %1298 = vmatprep.subr.mxu0 0.0
    %1299 = vmatpush1.msra.mxu0 0.0
    %1300 = vmatprep.subr.mxu0 0.0
    %1301 = vmatpush1.msra.mxu0 0.0
    %1302 = vmatprep.subr.mxu0 0.0
    %1303 = vmatpush1.msra.mxu0 0.0
    %1304 = vmatprep.subr.mxu0 0.0
    %1305 = vmatpush1.msra.mxu0 0.0
    %1306 = vmatprep.subr.mxu0 0.0
    %1307 = vmatpush1.msra.mxu0 0.0
    %1308 = vmatprep.subr.mxu0 0.0
    %1309 = vmatpush1.msra.mxu0 0.0
    %1310 = vmatprep.subr.mxu0 0.0
    %1311 = vmatpush1.msra.mxu0 0.0
    %1312 = vmatprep.subr.mxu0 0.0
    %1313 = vmatpush1.msra.mxu0 0.0
    %1314 = vmatprep.subr.mxu0 0.0
    %1315 = vmatpush1.msra.mxu0 0.0
    %1316 = vmatprep.subr.mxu0 0.0
    %1317 = vmatpush1.msra.mxu0 0.0
    %1318 = vmatprep.subr.mxu0 0.0
    %1319 = vmatpush1.msra.mxu0 0.0
    %1320 = vmatprep.subr.mxu0 0.0
    %1321 = vmatpush1.msra.mxu0 0.0
    %1322 = vmatprep.subr.mxu0 0.0
    %1323 = vmatpush1.msra.mxu0 0.0
    %1324 = vmatprep.subr.mxu0 0.0
    %1325 = vmatpush1.msra.mxu0 0.0
    %1326 = vmatprep.subr.mxu0 0.0
    %1327 = vmatpush1.msra.mxu0 0.0
    %1328 = vmatprep.subr.mxu0 0.0
    %1329 = vmatpush1.msra.mxu0 0.0
    %1330 = vmatprep.subr.mxu0 0.0
    %1331 = vmatpush1.msra.mxu0 0.0
    %1332 = vmatprep.subr.mxu0 0.0
    %1333 = vmatpush1.msra.mxu0 0.0
    %1334 = vmatprep.subr.mxu0 0.0
    %1335 = vmatpush1.msra.mxu0 0.0
    %1336 = vmatprep.subr.mxu0 0.0
    %1337 = vmatpush1.msra.mxu0 0.0
    %1338 = vmatprep.mubr.f32.mxu0 0.0
    %1339 = vmatmul.mubr.f32.gmra.mrb[0].mxu0 %v1272
    %v1340 = vpop.f32.mrb[0].mxu0
    %v1341 = vadd.f32 0.0, %v1340
    %v1342 = vpop.f32.mrb[0].mxu0
    %1343 = vdwg.mxu0
    %1344 = vrot.lane.b32.xlu0 %v165, 64
    %v1345 = vpop.permute.xlu0 %1344
    %v1348 = vsel %vm170, %v886, 0
    %1350 = vmatprep.subr.mxu0 0.0
    %1351 = vmatpush1.msra.mxu0 %v1345
    %1352 = vmatprep.subr.mxu0 0.0
    %1353 = vmatpush1.msra.mxu0 0.0
    %1354 = vmatprep.subr.mxu0 0.0
    %1355 = vmatpush1.msra.mxu0 0.0
    %1356 = vmatprep.subr.mxu0 0.0
    %1357 = vmatpush1.msra.mxu0 0.0
    %1358 = vmatprep.subr.mxu0 0.0
    %1359 = vmatpush1.msra.mxu0 0.0
    %1360 = vmatprep.subr.mxu0 0.0
    %1361 = vmatpush1.msra.mxu0 0.0
    %1362 = vmatprep.subr.mxu0 0.0
    %1363 = vmatpush1.msra.mxu0 0.0
    %1364 = vmatprep.subr.mxu0 0.0
    %1365 = vmatpush1.msra.mxu0 0.0
    %1366 = vmatprep.subr.mxu0 0.0
    %1367 = vmatpush1.msra.mxu0 0.0
    %1368 = vmatprep.subr.mxu0 0.0
    %1369 = vmatpush1.msra.mxu0 0.0
    %1370 = vmatprep.subr.mxu0 0.0
    %1371 = vmatpush1.msra.mxu0 0.0
    %1372 = vmatprep.subr.mxu0 0.0
    %1373 = vmatpush1.msra.mxu0 0.0
    %1374 = vmatprep.subr.mxu0 0.0
    %1375 = vmatpush1.msra.mxu0 0.0
    %1376 = vmatprep.subr.mxu0 0.0
    %1377 = vmatpush1.msra.mxu0 0.0
    %1378 = vmatprep.subr.mxu0 0.0
    %1379 = vmatpush1.msra.mxu0 0.0
    %1380 = vmatprep.subr.mxu0 0.0
    %1381 = vmatpush1.msra.mxu0 0.0
    %1382 = vmatprep.subr.mxu0 0.0
    %1383 = vmatpush1.msra.mxu0 0.0
    %1384 = vmatprep.subr.mxu0 0.0
    %1385 = vmatpush1.msra.mxu0 0.0
    %1386 = vmatprep.subr.mxu0 0.0
    %1387 = vmatpush1.msra.mxu0 0.0
    %1388 = vmatprep.subr.mxu0 0.0
    %1389 = vmatpush1.msra.mxu0 0.0
    %1390 = vmatprep.subr.mxu0 0.0
    %1391 = vmatpush1.msra.mxu0 0.0
    %1392 = vmatprep.subr.mxu0 0.0
    %1393 = vmatpush1.msra.mxu0 0.0
    %1394 = vmatprep.subr.mxu0 0.0
    %1395 = vmatpush1.msra.mxu0 0.0
    %1396 = vmatprep.subr.mxu0 0.0
    %1397 = vmatpush1.msra.mxu0 0.0
    %1398 = vmatprep.subr.mxu0 0.0
    %1399 = vmatpush1.msra.mxu0 0.0
    %1400 = vmatprep.subr.mxu0 0.0
    %1401 = vmatpush1.msra.mxu0 0.0
    %1402 = vmatprep.subr.mxu0 0.0
    %1403 = vmatpush1.msra.mxu0 0.0
    %1404 = vmatprep.subr.mxu0 0.0
    %1405 = vmatpush1.msra.mxu0 0.0
    %1406 = vmatprep.subr.mxu0 0.0
    %1407 = vmatpush1.msra.mxu0 0.0
    %1408 = vmatprep.subr.mxu0 0.0
    %1409 = vmatpush1.msra.mxu0 0.0
    %1410 = vmatprep.subr.mxu0 0.0
    %1411 = vmatpush1.msra.mxu0 0.0
    %1412 = vmatprep.subr.mxu0 0.0
    %1413 = vmatpush1.msra.mxu0 0.0
    %1414 = vmatprep.mubr.f32.mxu0 0.0
    %1415 = vmatmul.mubr.f32.gmra.mrb[0].mxu0 %v1348
    %v1416 = vpop.f32.mrb[0].mxu0
    %v1417 = vadd.f32 0.0, %v1416
    %v1418 = vpop.f32.mrb[0].mxu0
    %1419 = vdwg.mxu0
    %1420 = vrot.lane.b32.xlu0 %v167, 64
    %v1421 = vpop.permute.xlu0 %1420
    %v1424 = vsel %vm170, %v887, 0
    %1426 = vmatprep.subr.mxu0 0.0
    %1427 = vmatpush1.msra.mxu0 %v1421
    %1428 = vmatprep.subr.mxu0 0.0
    %1429 = vmatpush1.msra.mxu0 0.0
    %1430 = vmatprep.subr.mxu0 0.0
    %1431 = vmatpush1.msra.mxu0 0.0
    %1432 = vmatprep.subr.mxu0 0.0
    %1433 = vmatpush1.msra.mxu0 0.0
    %1434 = vmatprep.subr.mxu0 0.0
    %1435 = vmatpush1.msra.mxu0 0.0
    %1436 = vmatprep.subr.mxu0 0.0
    %1437 = vmatpush1.msra.mxu0 0.0
    %1438 = vmatprep.subr.mxu0 0.0
    %1439 = vmatpush1.msra.mxu0 0.0
    %1440 = vmatprep.subr.mxu0 0.0
    %1441 = vmatpush1.msra.mxu0 0.0
    %1442 = vmatprep.subr.mxu0 0.0
    %1443 = vmatpush1.msra.mxu0 0.0
    %1444 = vmatprep.subr.mxu0 0.0
    %1445 = vmatpush1.msra.mxu0 0.0
    %1446 = vmatprep.subr.mxu0 0.0
    %1447 = vmatpush1.msra.mxu0 0.0
    %1448 = vmatprep.subr.mxu0 0.0
    %1449 = vmatpush1.msra.mxu0 0.0
    %1450 = vmatprep.subr.mxu0 0.0
    %1451 = vmatpush1.msra.mxu0 0.0
    %1452 = vmatprep.subr.mxu0 0.0
    %1453 = vmatpush1.msra.mxu0 0.0
    %1454 = vmatprep.subr.mxu0 0.0
    %1455 = vmatpush1.msra.mxu0 0.0
    %1456 = vmatprep.subr.mxu0 0.0
    %1457 = vmatpush1.msra.mxu0 0.0
    %1458 = vmatprep.subr.mxu0 0.0
    %1459 = vmatpush1.msra.mxu0 0.0
    %1460 = vmatprep.subr.mxu0 0.0
    %1461 = vmatpush1.msra.mxu0 0.0
    %1462 = vmatprep.subr.mxu0 0.0
    %1463 = vmatpush1.msra.mxu0 0.0
    %1464 = vmatprep.subr.mxu0 0.0
    %1465 = vmatpush1.msra.mxu0 0.0
    %1466 = vmatprep.subr.mxu0 0.0
    %1467 = vmatpush1.msra.mxu0 0.0
    %1468 = vmatprep.subr.mxu0 0.0
    %1469 = vmatpush1.msra.mxu0 0.0
    %1470 = vmatprep.subr.mxu0 0.0
    %1471 = vmatpush1.msra.mxu0 0.0
    %1472 = vmatprep.subr.mxu0 0.0
    %1473 = vmatpush1.msra.mxu0 0.0
    %1474 = vmatprep.subr.mxu0 0.0
    %1475 = vmatpush1.msra.mxu0 0.0
    %1476 = vmatprep.subr.mxu0 0.0
    %1477 = vmatpush1.msra.mxu0 0.0
    %1478 = vmatprep.subr.mxu0 0.0
    %1479 = vmatpush1.msra.mxu0 0.0
    %1480 = vmatprep.subr.mxu0 0.0
    %1481 = vmatpush1.msra.mxu0 0.0
    %1482 = vmatprep.subr.mxu0 0.0
    %1483 = vmatpush1.msra.mxu0 0.0
    %1484 = vmatprep.subr.mxu0 0.0
    %1485 = vmatpush1.msra.mxu0 0.0
    %1486 = vmatprep.subr.mxu0 0.0
    %1487 = vmatpush1.msra.mxu0 0.0
    %1488 = vmatprep.subr.mxu0 0.0
    %1489 = vmatpush1.msra.mxu0 0.0
    %1490 = vmatprep.mubr.f32.mxu0 0.0
    %1491 = vmatmul.mubr.f32.gmra.mrb[0].mxu0 %v1424
    %v1492 = vpop.f32.mrb[0].mxu0
    %v1493 = vadd.f32 0.0, %v1492
    %v1494 = vpop.f32.mrb[0].mxu0
    %1495 = vdwg.mxu0
    %1498 = vrot.lane.b32.xlu0 %v1113, 8
    %v1499 = vpop.permute.xlu0 %1498
    %1500 = vrot.lane.b32.xlu0 %v1189, 8
    %v1501 = vpop.permute.xlu0 %1500
    %1506 = vrot.lane.b32.xlu0 %v1265, 16
    %v1507 = vpop.permute.xlu0 %1506
    %1508 = vrot.lane.b32.xlu0 %v1341, 16
    %v1509 = vpop.permute.xlu0 %1508
    %1514 = vrot.lane.b32.xlu0 %v1417, 24
    %v1515 = vpop.permute.xlu0 %1514
    %1516 = vrot.lane.b32.xlu0 %v1493, 24
    %v1517 = vpop.permute.xlu0 %1516
    %v1520 = vsel %vm170, %v961, %v1499
    %v1521 = vsel %vm170, %v1037, %v1501
    %vm1522 = vcmask 130048
    %v1523 = vsel %vm1522, %v1520, %v1507
    %v1524 = vsel %vm1522, %v1521, %v1509
    %vm1525 = vcmask 195584
    %v1526 = vsel %vm1525, %v1523, %v1515
    %v1527 = vsel %vm1525, %v1524, %v1517
    %v1528 = vld [vmem:[#allocation7] sm:$0xff]
    %v1529 = vld [vmem:[#allocation7 + $0x8] sm:$0xff]
    %v1530 = vld [vmem:[#allocation7 + $0x10] sm:$0xff]
    %v1531 = vld [vmem:[#allocation7 + $0x18] sm:$0xff]
    %1532 = vrot.lane.b32.xlu0 %v70, 32
    %v1533 = vpop.permute.xlu0 %1532
    %v1536 = vsel %vm72, %v1526, 0
    %v1539 = vsel %vm72, %v1527, 0
    %1541 = vmatprep.subr.mxu0 0.0
    %1542 = vmatpush1.msra.mxu0 %v1528
    %1543 = vmatprep.subr.mxu0 0.0
    %1544 = vmatpush1.msra.mxu0 %v1529
    %1545 = vmatprep.subr.mxu0 0.0
    %1546 = vmatpush1.msra.mxu0 %v1530
    %1547 = vmatprep.subr.mxu0 0.0
    %1548 = vmatpush1.msra.mxu0 %v1531
    %1549 = vmatprep.subr.mxu0 0.0
    %1550 = vmatpush1.msra.mxu0 0.0
    %1551 = vmatprep.subr.mxu0 0.0
    %1552 = vmatpush1.msra.mxu0 0.0
    %1553 = vmatprep.subr.mxu0 0.0
    %1554 = vmatpush1.msra.mxu0 0.0
    %1555 = vmatprep.subr.mxu0 0.0
    %1556 = vmatpush1.msra.mxu0 0.0
    %1557 = vmatprep.subr.mxu0 0.0
    %1558 = vmatpush1.msra.mxu0 0.0
    %1559 = vmatprep.subr.mxu0 0.0
    %1560 = vmatpush1.msra.mxu0 0.0
    %1561 = vmatprep.subr.mxu0 0.0
    %1562 = vmatpush1.msra.mxu0 0.0
    %1563 = vmatprep.subr.mxu0 0.0
    %1564 = vmatpush1.msra.mxu0 0.0
    %1565 = vmatprep.subr.mxu0 0.0
    %1566 = vmatpush1.msra.mxu0 0.0
    %1567 = vmatprep.subr.mxu0 0.0
    %1568 = vmatpush1.msra.mxu0 0.0
    %1569 = vmatprep.subr.mxu0 0.0
    %1570 = vmatpush1.msra.mxu0 0.0
    %1571 = vmatprep.subr.mxu0 0.0
    %1572 = vmatpush1.msra.mxu0 0.0
    %1573 = vmatprep.subr.mxu0 0.0
    %1574 = vmatpush1.msra.mxu0 0.0
    %1575 = vmatprep.subr.mxu0 0.0
    %1576 = vmatpush1.msra.mxu0 0.0
    %1577 = vmatprep.subr.mxu0 0.0
    %1578 = vmatpush1.msra.mxu0 0.0
    %1579 = vmatprep.subr.mxu0 0.0
    %1580 = vmatpush1.msra.mxu0 0.0
    %1581 = vmatprep.subr.mxu0 0.0
    %1582 = vmatpush1.msra.mxu0 0.0
    %1583 = vmatprep.subr.mxu0 0.0
    %1584 = vmatpush1.msra.mxu0 0.0
    %1585 = vmatprep.subr.mxu0 0.0
    %1586 = vmatpush1.msra.mxu0 0.0
    %1587 = vmatprep.subr.mxu0 0.0
    %1588 = vmatpush1.msra.mxu0 0.0
    %1589 = vmatprep.subr.mxu0 0.0
    %1590 = vmatpush1.msra.mxu0 0.0
    %1591 = vmatprep.subr.mxu0 0.0
    %1592 = vmatpush1.msra.mxu0 0.0
    %1593 = vmatprep.subr.mxu0 0.0
    %1594 = vmatpush1.msra.mxu0 0.0
    %1595 = vmatprep.subr.mxu0 0.0
    %1596 = vmatpush1.msra.mxu0 0.0
    %1597 = vmatprep.subr.mxu0 0.0
    %1598 = vmatpush1.msra.mxu0 0.0
    %1599 = vmatprep.subr.mxu0 0.0
    %1600 = vmatpush1.msra.mxu0 0.0
    %1601 = vmatprep.subr.mxu0 0.0
    %1602 = vmatpush1.msra.mxu0 0.0
    %1603 = vmatprep.subr.mxu0 0.0
    %1604 = vmatpush1.msra.mxu0 0.0
    %1605 = vmatprep.mubr.f32.mxu0 0.0
    %1606 = vmatmul.mubr.f32.gmra.mrb[0].mxu0 %v1536
    %v1607 = vpop.f32.mrb[0].mxu0
    %v1608 = vadd.f32 %v1533, %v1607
    %v1609 = vpop.f32.mrb[0].mxu0
    %1610 = vmatprep.mubr.f32.mxu0 0.0
    %1611 = vmatmul.mubr.f32.gmra.mrb[0].mxu0 %v1539
    %v1612 = vpop.f32.mrb[0].mxu0
    %v1613 = vadd.f32 %v1533, %v1612
    %v1614 = vpop.f32.mrb[0].mxu0
    %1615 = vdwg.mxu0
    %1616 = vst.msk [vmem:[#allocation8] sm:$0xff] %vm72, %v1608
    %1617 = vst.msk [vmem:[#allocation8 + $0x8] sm:$0xff] %vm72, %v1613
    // Predicated region
    $region30: #{apply.1} parent=1 // pred_check
      _
    $region31: #{apply.1} parent=1 // pred_check_branch
      %1619 = sbr.rel (0) target = $region33
    $region32: #{apply.1} parent=1 // pred_region
      %s1621 = ssub.s32 256, 256
      %1622 = vsyncadd [#allocation4], %s1621
      %s1623 = sshll.u32 [#allocation8], 4
      %s1624 = int_to_ptr.vmem [resolvable:$true] %s1623
      %1629 = dma.vmem_to_hbm [thread:$0]  %s1624, 256, %s4, [#allocation4], 128, 128, 8
    $region33: #{apply.1} parent=1 // pred_fallthru
      _
    // Predicated region
    $region34: #{apply.1} parent=1 // pred_check
      _
    $region35: #{apply.1} parent=1 // pred_check_branch
      %1631 = sbr.rel (0) target = $region37
    $region36: #{apply.1} parent=1 // pred_region
      %1632 = dma.done [#allocation4], 256
    $region37: #{apply.1} parent=1 // pred_fallthru
      _
    %1633 = vsyncpa [#allocation3], 1
    %1634 = vsyncpa [#allocation6], 1
    %1635 = vsyncpa [#allocation4], 1

</llo_original>
